<compile_context>
chip_gen: v7x
topology: tpu7x:2x2x1
jax: 0.10.0
libtpu: 0.0.40
codegen_flags: <defaults>
</compile_context>

<pallas_src>
import jax
import jax.numpy as jnp
from jax.experimental import pallas as pl
from jax.experimental.pallas import tpu as pltpu


OUT_PAD = 128      # lane-dense padded width of the final (3-wide) output
ROW_ALIGN = 16     # bf16 native tile is (16, 128): align batch rows to 16
MAX_TB = 4096      # per-core tile cap (keeps v7x's 64 MiB/TC VMEM comfortable)


def mlp_kernel(x_ref,
               w1_ref, b1_ref,
               w2_ref, b2_ref,
               w3_ref, b3_ref,
               w4_ref, b4_ref,
               w5_ref, b5_ref,
               o_ref):
    # Hidden path runs in bf16 on the MXU with f32 accumulation.
    h = x_ref[...].astype(jnp.bfloat16)

    def linear_relu(h, w_ref, b_ref):
        y = jnp.dot(h, w_ref[...], preferred_element_type=jnp.float32)
        y = y + b_ref[...]
        return jnp.maximum(y, 0.0).astype(jnp.bfloat16)

    h = linear_relu(h, w1_ref, b1_ref)   # 15  -> 128
    h = linear_relu(h, w2_ref, b2_ref)   # 128 -> 256
    h = linear_relu(h, w3_ref, b3_ref)   # 256 -> 256
    h = linear_relu(h, w4_ref, b4_ref)   # 256 -> 128

    # Final layer (padded to 128 output lanes) + sigmoid.
    # sigmoid(x) = 0.5 * tanh(0.5 * x) + 0.5  -> single EUP op, VPU-cheap rest.
    logits = jnp.dot(h, w5_ref[...], preferred_element_type=jnp.float32)
    logits = logits + b5_ref[...]
    o_ref[...] = (0.5 * jnp.tanh(0.5 * logits) + 0.5).astype(o_ref.dtype)


def _round_up(x, m):
    return ((x + m - 1) // m) * m


def _full_spec(shape):
    """Full-extent block, constant index_map: weight stays VMEM-resident."""
    ndim = len(shape)
    return pl.BlockSpec(shape, lambda i, _n=ndim: (0,) * _n)


def _two_tensorcores():
    """Best-effort detection of 2-TC chips (v7x); safe default is 1 TC."""
    try:
        kind = jax.devices()[0].device_kind.lower()
        return "v7" in kind
    except Exception:
        return False


def _choose_tile(padded_batch, requested):
    if requested is not None:
        tb = min(_round_up(int(requested), ROW_ALIGN), padded_batch)
    elif _two_tensorcores() and padded_batch >= 2 * ROW_ALIGN:
        # Even grid of >= 2 so both TensorCores get a tile.
        tb = min(2048, _round_up(padded_batch // 2, ROW_ALIGN))
    elif padded_batch <= 4096:
        tb = padded_batch                 # single grid step: no per-step overhead
    else:
        tb = 2048
    return max(ROW_ALIGN, min(tb, MAX_TB))


def neural_network_forward(x, params, tb=None):
    """x: (batch, 15) f32.  params: list of (W, b), W shaped (in, out), b (1, out)."""
    batch, in_dim = x.shape
    out_dim = params[-1][0].shape[1]

    # Align batch to 16 rows (bf16 packing), then choose TB and re-pad so TB
    # evenly divides the padded batch (no masked final block on the store path).
    padded_batch = _round_up(batch, ROW_ALIGN)
    TB = _choose_tile(padded_batch, tb)
    padded_batch = _round_up(padded_batch, TB)
    if padded_batch != batch:
        x = jnp.pad(x, ((0, padded_batch - batch), (0, 0)))
    grid = (padded_batch // TB,)

    # Cast weights to bf16; keep biases f32 (added to the f32 accumulator).
    ws = [w.astype(jnp.bfloat16) for w, _ in params]
    bs = [b.astype(jnp.float32).reshape(1, -1) for _, b in params]

    # Zero-pad the last layer to 128 output columns (lane-dense stores).
    ws[-1] = jnp.pad(ws[-1], ((0, 0), (0, OUT_PAD - out_dim)))
    bs[-1] = jnp.pad(bs[-1], ((0, 0), (0, OUT_PAD - out_dim)))

    flat = []
    for w, b in zip(ws, bs):
        flat.append(w)
        flat.append(b)

    in_specs = [pl.BlockSpec((TB, in_dim), lambda i: (i, 0))]
    in_specs += [_full_spec(a.shape) for a in flat]
    out_spec = pl.BlockSpec((TB, OUT_PAD), lambda i: (i, 0))

    # VMEM budget: ~0.3 MB of bf16 weights (x2 buffers) + ~4 KB per batch row
    # of blocks/temps.  Only raise the scoped limit when we'd exceed the small
    # default budgets (16 MiB on v5e, 32 MiB on v6e/v7x); cap at 48 MiB so we
    # stay inside v7x's 64 MiB/TC physical VMEM.
    weight_bytes = sum(int(a.size) * a.dtype.itemsize for a in flat)
    vmem_est = 2 * weight_bytes + TB * 4096
    vmem_limit = None
    if vmem_est > (12 << 20):
        vmem_limit = min(_round_up(int(vmem_est * 3 // 2), 1 << 20), 48 << 20)

    out = pl.pallas_call(
        mlp_kernel,
        out_shape=jax.ShapeDtypeStruct((padded_batch, OUT_PAD), jnp.bfloat16),
        grid=grid,
        in_specs=in_specs,
        out_specs=out_spec,
        compiler_params=pltpu.CompilerParams(
            dimension_semantics=("parallel",),
            vmem_limit_bytes=vmem_limit),
    )(x, *flat)

    # Restore the module's (batch, 3) f32 output.  (Callers that can consume
    # the padded bf16 slab directly may skip this slice/cast.)
    return out[:batch, :out_dim].astype(jnp.float32)


def init_params(key):
    """Deterministic init mimicking PyTorch's default Linear init:
    U(-1/sqrt(fan_in), 1/sqrt(fan_in)) for both weights and biases.
    Weights stored pre-transposed as (in, out) so the kernel does x @ W."""
    dims = [15, 128, 256, 256, 128, 3]
    params = []
    for i in range(len(dims) - 1):
        fan_in, fan_out = dims[i], dims[i + 1]
        key, kw, kb = jax.random.split(key, 3)
        bound = 1.0 / jnp.sqrt(jnp.float32(fan_in))
        w = jax.random.uniform(kw, (fan_in, fan_out), jnp.float32, -bound, bound)
        b = jax.random.uniform(kb, (1, fan_out), jnp.float32, -bound, bound)
        params.append((w, b))
    return params


def reference_forward(x, params):
    """Pure-JAX reference with the same bf16 weight/activation precision and a
    bf16-rounded final output (matching the kernel's bf16 store)."""
    h = x.astype(jnp.bfloat16)
    for i, (w, b) in enumerate(params):
        y = jnp.dot(h, w.astype(jnp.bfloat16),
                    preferred_element_type=jnp.float32) + b.astype(jnp.float32)
        if i < len(params) - 1:
            h = jnp.maximum(y, 0.0).astype(jnp.bfloat16)
        else:
            h = jax.nn.sigmoid(y).astype(jnp.bfloat16).astype(jnp.float32)
    return h


if __name__ == "__main__":
    key = jax.random.PRNGKey(0)
    key, kx = jax.random.split(key)

    batch = 256
    x = jax.random.normal(kx, (batch, 15), dtype=jnp.float32)
    params = init_params(key)

    # Default TB heuristic: a single 256-row tile (two 128-row tiles on v7x).
    out = neural_network_forward(x, params)
    out = jax.block_until_ready(out)

    ref = reference_forward(x, params)
    assert out.shape == (batch, 3), out.shape
    # Tolerance covers bf16 output quantization (~4e-3 near 1.0) plus bf16
    # matmul accumulation differences.
    max_err = float(jnp.max(jnp.abs(out - ref)))
    assert max_err < 1e-2, f"max abs err = {max_err}"

    print("KERNEL_OK")
</pallas_src>

<mosaic_0001>
module attributes {stable_mosaic.version = 11 : i64} {
  func.func @mlp_kernel(%arg0: i32, %arg1: memref<256x15xf32, #tpu.memory_space<vmem>>, %arg2: memref<15x128xbf16, #tpu.memory_space<vmem>>, %arg3: memref<1x128xf32, #tpu.memory_space<vmem>>, %arg4: memref<128x256xbf16, #tpu.memory_space<vmem>>, %arg5: memref<1x256xf32, #tpu.memory_space<vmem>>, %arg6: memref<256x256xbf16, #tpu.memory_space<vmem>>, %arg7: memref<1x256xf32, #tpu.memory_space<vmem>>, %arg8: memref<256x128xbf16, #tpu.memory_space<vmem>>, %arg9: memref<1x128xf32, #tpu.memory_space<vmem>>, %arg10: memref<128x128xbf16, #tpu.memory_space<vmem>>, %arg11: memref<1x128xf32, #tpu.memory_space<vmem>>, %arg12: memref<256x128xbf16, #tpu.memory_space<vmem>>) attributes {dimension_semantics = [#tpu.dimension_semantics<parallel>], iteration_bounds = array<i64: 1>, scalar_prefetch = 0 : i64, scratch_operands = 0 : i64, tpu.core_type = #tpu.core_type<tc>, window_params = [{transform_indices = @transform_0, window_bounds = array<i64: 256, 15>}, {pipeline_mode = #tpu.pipeline_mode<synchronous>, transform_indices = @transform_1, window_bounds = array<i64: 15, 128>}, {pipeline_mode = #tpu.pipeline_mode<synchronous>, transform_indices = @transform_2, window_bounds = array<i64: 1, 128>}, {pipeline_mode = #tpu.pipeline_mode<synchronous>, transform_indices = @transform_3, window_bounds = array<i64: 128, 256>}, {pipeline_mode = #tpu.pipeline_mode<synchronous>, transform_indices = @transform_4, window_bounds = array<i64: 1, 256>}, {pipeline_mode = #tpu.pipeline_mode<synchronous>, transform_indices = @transform_5, window_bounds = array<i64: 256, 256>}, {pipeline_mode = #tpu.pipeline_mode<synchronous>, transform_indices = @transform_6, window_bounds = array<i64: 1, 256>}, {pipeline_mode = #tpu.pipeline_mode<synchronous>, transform_indices = @transform_7, window_bounds = array<i64: 256, 128>}, {pipeline_mode = #tpu.pipeline_mode<synchronous>, transform_indices = @transform_8, window_bounds = array<i64: 1, 128>}, {pipeline_mode = #tpu.pipeline_mode<synchronous>, transform_indices = @transform_9, window_bounds = array<i64: 128, 128>}, {pipeline_mode = #tpu.pipeline_mode<synchronous>, transform_indices = @transform_10, window_bounds = array<i64: 1, 128>}, {transform_indices = @transform_11, window_bounds = array<i64: 256, 128>}]} {
    %c0 = arith.constant 0 : index
    %c0_0 = arith.constant 0 : index
    %0 = vector.load %arg1[%c0, %c0_0] : memref<256x15xf32, #tpu.memory_space<vmem>>, vector<256x15xf32>
    %1 = arith.truncf %0 : vector<256x15xf32> to vector<256x15xbf16>
    %c0_1 = arith.constant 0 : index
    %c0_2 = arith.constant 0 : index
    %2 = vector.load %arg2[%c0_1, %c0_2] : memref<15x128xbf16, #tpu.memory_space<vmem>>, vector<15x128xbf16>
    %cst = arith.constant dense<0.000000e+00> : vector<256x128xf32>
    %3 = tpu.matmul %1, %2, %cst {dimension_numbers = #tpu.dot_dimension_numbers<[1], [0], [0], [1], [0, 0, 1, 1], [], []>} : vector<256x15xbf16>, vector<15x128xbf16>, vector<256x128xf32> -> vector<256x128xf32>
    %c0_3 = arith.constant 0 : index
    %c0_4 = arith.constant 0 : index
    %4 = vector.load %arg3[%c0_3, %c0_4] : memref<1x128xf32, #tpu.memory_space<vmem>>, vector<1x128xf32>
    %5 = vector.broadcast %4 : vector<1x128xf32> to vector<256x128xf32>
    %6 = arith.addf %3, %5 : vector<256x128xf32>
    %cst_5 = arith.constant 0.000000e+00 : f32
    %7 = vector.broadcast %cst_5 : f32 to vector<256x128xf32>
    %8 = arith.maximumf %6, %7 : vector<256x128xf32>
    %9 = arith.truncf %8 : vector<256x128xf32> to vector<256x128xbf16>
    %c0_6 = arith.constant 0 : index
    %c0_7 = arith.constant 0 : index
    %10 = vector.load %arg4[%c0_6, %c0_7] : memref<128x256xbf16, #tpu.memory_space<vmem>>, vector<128x256xbf16>
    %cst_8 = arith.constant dense<0.000000e+00> : vector<256x256xf32>
    %11 = tpu.matmul %9, %10, %cst_8 {dimension_numbers = #tpu.dot_dimension_numbers<[1], [0], [0], [1], [0, 0, 1, 1], [], []>} : vector<256x128xbf16>, vector<128x256xbf16>, vector<256x256xf32> -> vector<256x256xf32>
    %c0_9 = arith.constant 0 : index
    %c0_10 = arith.constant 0 : index
    %12 = vector.load %arg5[%c0_9, %c0_10] : memref<1x256xf32, #tpu.memory_space<vmem>>, vector<1x256xf32>
    %13 = vector.broadcast %12 : vector<1x256xf32> to vector<256x256xf32>
    %14 = arith.addf %11, %13 : vector<256x256xf32>
    %cst_11 = arith.constant 0.000000e+00 : f32
    %15 = vector.broadcast %cst_11 : f32 to vector<256x256xf32>
    %16 = arith.maximumf %14, %15 : vector<256x256xf32>
    %17 = arith.truncf %16 : vector<256x256xf32> to vector<256x256xbf16>
    %c0_12 = arith.constant 0 : index
    %c0_13 = arith.constant 0 : index
    %18 = vector.load %arg6[%c0_12, %c0_13] : memref<256x256xbf16, #tpu.memory_space<vmem>>, vector<256x256xbf16>
    %cst_14 = arith.constant dense<0.000000e+00> : vector<256x256xf32>
    %19 = tpu.matmul %17, %18, %cst_14 {dimension_numbers = #tpu.dot_dimension_numbers<[1], [0], [0], [1], [0, 0, 1, 1], [], []>} : vector<256x256xbf16>, vector<256x256xbf16>, vector<256x256xf32> -> vector<256x256xf32>
    %c0_15 = arith.constant 0 : index
    %c0_16 = arith.constant 0 : index
    %20 = vector.load %arg7[%c0_15, %c0_16] : memref<1x256xf32, #tpu.memory_space<vmem>>, vector<1x256xf32>
    %21 = vector.broadcast %20 : vector<1x256xf32> to vector<256x256xf32>
    %22 = arith.addf %19, %21 : vector<256x256xf32>
    %cst_17 = arith.constant 0.000000e+00 : f32
    %23 = vector.broadcast %cst_17 : f32 to vector<256x256xf32>
    %24 = arith.maximumf %22, %23 : vector<256x256xf32>
    %25 = arith.truncf %24 : vector<256x256xf32> to vector<256x256xbf16>
    %c0_18 = arith.constant 0 : index
    %c0_19 = arith.constant 0 : index
    %26 = vector.load %arg8[%c0_18, %c0_19] : memref<256x128xbf16, #tpu.memory_space<vmem>>, vector<256x128xbf16>
    %cst_20 = arith.constant dense<0.000000e+00> : vector<256x128xf32>
    %27 = tpu.matmul %25, %26, %cst_20 {dimension_numbers = #tpu.dot_dimension_numbers<[1], [0], [0], [1], [0, 0, 1, 1], [], []>} : vector<256x256xbf16>, vector<256x128xbf16>, vector<256x128xf32> -> vector<256x128xf32>
    %c0_21 = arith.constant 0 : index
    %c0_22 = arith.constant 0 : index
    %28 = vector.load %arg9[%c0_21, %c0_22] : memref<1x128xf32, #tpu.memory_space<vmem>>, vector<1x128xf32>
    %29 = vector.broadcast %28 : vector<1x128xf32> to vector<256x128xf32>
    %30 = arith.addf %27, %29 : vector<256x128xf32>
    %cst_23 = arith.constant 0.000000e+00 : f32
    %31 = vector.broadcast %cst_23 : f32 to vector<256x128xf32>
    %32 = arith.maximumf %30, %31 : vector<256x128xf32>
    %33 = arith.truncf %32 : vector<256x128xf32> to vector<256x128xbf16>
    %c0_24 = arith.constant 0 : index
    %c0_25 = arith.constant 0 : index
    %34 = vector.load %arg10[%c0_24, %c0_25] : memref<128x128xbf16, #tpu.memory_space<vmem>>, vector<128x128xbf16>
    %cst_26 = arith.constant dense<0.000000e+00> : vector<256x128xf32>
    %35 = tpu.matmul %33, %34, %cst_26 {dimension_numbers = #tpu.dot_dimension_numbers<[1], [0], [0], [1], [0, 0, 1, 1], [], []>} : vector<256x128xbf16>, vector<128x128xbf16>, vector<256x128xf32> -> vector<256x128xf32>
    %c0_27 = arith.constant 0 : index
    %c0_28 = arith.constant 0 : index
    %36 = vector.load %arg11[%c0_27, %c0_28] : memref<1x128xf32, #tpu.memory_space<vmem>>, vector<1x128xf32>
    %37 = vector.broadcast %36 : vector<1x128xf32> to vector<256x128xf32>
    %38 = arith.addf %35, %37 : vector<256x128xf32>
    %cst_29 = arith.constant 5.000000e-01 : f32
    %39 = vector.broadcast %cst_29 : f32 to vector<256x128xf32>
    %40 = arith.mulf %39, %38 : vector<256x128xf32>
    %41 = math.tanh %40 : vector<256x128xf32>
    %cst_30 = arith.constant 5.000000e-01 : f32
    %42 = vector.broadcast %cst_30 : f32 to vector<256x128xf32>
    %43 = arith.mulf %42, %41 : vector<256x128xf32>
    %cst_31 = arith.constant 5.000000e-01 : f32
    %44 = vector.broadcast %cst_31 : f32 to vector<256x128xf32>
    %45 = arith.addf %43, %44 : vector<256x128xf32>
    %46 = arith.truncf %45 : vector<256x128xf32> to vector<256x128xbf16>
    %c0_32 = arith.constant 0 : index
    %c0_33 = arith.constant 0 : index
    %47 = vector.load %arg12[%c0_32, %c0_33] : memref<256x128xbf16, #tpu.memory_space<vmem>>, vector<256x128xbf16>
    tpu.vector_store %arg12[%c0_32, %c0_33], %46 {strides = array<i32>} : memref<256x128xbf16, #tpu.memory_space<vmem>>, vector<256x128xbf16>,
    return
  }
  func.func @transform_0(%arg0: i32) -> (i32, i32) {
    %c0_i32 = arith.constant 0 : i32
    %c0_i32_0 = arith.constant 0 : i32
    return %arg0, %c0_i32 : i32, i32
  }
  func.func @transform_1(%arg0: i32) -> (i32, i32) {
    %c0_i32 = arith.constant 0 : i32
    %c0_i32_0 = arith.constant 0 : i32
    %c0_i32_1 = arith.constant 0 : i32
    return %c0_i32, %c0_i32_0 : i32, i32
  }
  func.func @transform_2(%arg0: i32) -> (i32, i32) {
    %c0_i32 = arith.constant 0 : i32
    %c0_i32_0 = arith.constant 0 : i32
    %c0_i32_1 = arith.constant 0 : i32
    return %c0_i32, %c0_i32_0 : i32, i32
  }
  func.func @transform_3(%arg0: i32) -> (i32, i32) {
    %c0_i32 = arith.constant 0 : i32
    %c0_i32_0 = arith.constant 0 : i32
    %c0_i32_1 = arith.constant 0 : i32
    return %c0_i32, %c0_i32_0 : i32, i32
  }
  func.func @transform_4(%arg0: i32) -> (i32, i32) {
    %c0_i32 = arith.constant 0 : i32
    %c0_i32_0 = arith.constant 0 : i32
    %c0_i32_1 = arith.constant 0 : i32
    return %c0_i32, %c0_i32_0 : i32, i32
  }
  func.func @transform_5(%arg0: i32) -> (i32, i32) {
    %c0_i32 = arith.constant 0 : i32
    %c0_i32_0 = arith.constant 0 : i32
    %c0_i32_1 = arith.constant 0 : i32
    return %c0_i32, %c0_i32_0 : i32, i32
  }
  func.func @transform_6(%arg0: i32) -> (i32, i32) {
    %c0_i32 = arith.constant 0 : i32
    %c0_i32_0 = arith.constant 0 : i32
    %c0_i32_1 = arith.constant 0 : i32
    return %c0_i32, %c0_i32_0 : i32, i32
  }
  func.func @transform_7(%arg0: i32) -> (i32, i32) {
    %c0_i32 = arith.constant 0 : i32
    %c0_i32_0 = arith.constant 0 : i32
    %c0_i32_1 = arith.constant 0 : i32
    return %c0_i32, %c0_i32_0 : i32, i32
  }
  func.func @transform_8(%arg0: i32) -> (i32, i32) {
    %c0_i32 = arith.constant 0 : i32
    %c0_i32_0 = arith.constant 0 : i32
    %c0_i32_1 = arith.constant 0 : i32
    return %c0_i32, %c0_i32_0 : i32, i32
  }
  func.func @transform_9(%arg0: i32) -> (i32, i32) {
    %c0_i32 = arith.constant 0 : i32
    %c0_i32_0 = arith.constant 0 : i32
    %c0_i32_1 = arith.constant 0 : i32
    return %c0_i32, %c0_i32_0 : i32, i32
  }
  func.func @transform_10(%arg0: i32) -> (i32, i32) {
    %c0_i32 = arith.constant 0 : i32
    %c0_i32_0 = arith.constant 0 : i32
    %c0_i32_1 = arith.constant 0 : i32
    return %c0_i32, %c0_i32_0 : i32, i32
  }
  func.func @transform_11(%arg0: i32) -> (i32, i32) {
    %c0_i32 = arith.constant 0 : i32
    %c0_i32_0 = arith.constant 0 : i32
    return %arg0, %c0_i32 : i32, i32
  }
}

</mosaic_0001>

<llo_original>
// kernel: tpu_custom_call.1
$region0: #{tpu_custom_call.1}
  #allocation0 [shape = 'u32[]', space=smem, size = 0x4, offset = 0x4, fixed_abs, tag = 'smem constant byte address 0x4 - core index']
  #allocation1 [shape = 'u32[144,128]{1,0:T(1,128)}', space=vmem, size = 0x12000, scoped, tag = 'internal scratch']
  %s0 = inlined_call_operand.vmem [shape: f32[256,15], index: 0, kind: input, shape index: {}]
  %s1 = inlined_call_operand.hbm [shape: bf16[15,128], index: 1, kind: input, shape index: {}]
  %s2 = inlined_call_operand.hbm [shape: f32[1,128], index: 2, kind: input, shape index: {}]
  %s3 = inlined_call_operand.hbm [shape: bf16[128,256], index: 3, kind: input, shape index: {}]
  %s4 = inlined_call_operand.vmem [shape: f32[1,256], index: 4, kind: input, shape index: {}]
  %s5 = inlined_call_operand.vmem [shape: bf16[256,256], index: 5, kind: input, shape index: {}]
  %s6 = inlined_call_operand.hbm [shape: f32[1,256], index: 6, kind: input, shape index: {}]
  %s7 = inlined_call_operand.hbm [shape: bf16[256,128], index: 7, kind: input, shape index: {}]
  %s8 = inlined_call_operand.hbm [shape: f32[1,128], index: 8, kind: input, shape index: {}]
  %s9 = inlined_call_operand.vmem [shape: bf16[128,128], index: 9, kind: input, shape index: {}]
  %s10 = inlined_call_operand.vmem [shape: f32[1,128], index: 10, kind: input, shape index: {}]
  %s11 = inlined_call_operand.hbm [shape: bf16[256,128], index: 11, kind: output, shape index: {}]
  %s12 = sld [smem:[#allocation0]]
  $region78: #{tpu_custom_call.1} parent=0
    _
  %s14 = ssub.s32 1, %s12
  %s15 = scalar_select 0, %s14, %s12
  $region1: #{tpu_custom_call.1} parent=0
    #allocation2 [shape = 'u8[4096]{0}', space=vmem, size = 0x1000, scoped, tag = 'input window, operand 1, single buffered']
    #allocation3 [shape = 's32[1]{0}', space=sflag, size = 0x4, scoped, tag = 'scoped memory for tpu_custom_call.1']
    #allocation4 [shape = 's32[1]{0}', space=sflag, size = 0x4, scoped, tag = 'scoped memory for tpu_custom_call.1']
    #allocation5 [shape = 'u8[512]{0}', space=vmem, size = 0x400, scoped, tag = 'input window, operand 2, single buffered']
    #allocation6 [shape = 's32[1]{0}', space=sflag, size = 0x4, scoped, tag = 'scoped memory for tpu_custom_call.1']
    #allocation7 [shape = 'u8[65536]{0}', space=vmem, size = 0x10000, scoped, tag = 'input window, operand 3, single buffered']
    #allocation8 [shape = 'u8[1024]{0}', space=vmem, size = 0x400, scoped, tag = 'input window, operand 6, single buffered']
    #allocation9 [shape = 's32[1]{0}', space=sflag, size = 0x4, scoped, tag = 'scoped memory for tpu_custom_call.1']
    #allocation10 [shape = 'u8[65536]{0}', space=vmem, size = 0x10000, scoped, tag = 'input window, operand 7, single buffered']
    #allocation11 [shape = 'u8[512]{0}', space=vmem, size = 0x400, scoped, tag = 'input window, operand 8, single buffered']
    #allocation12 [shape = 's32[1]{0}', space=sflag, size = 0x4, scoped, tag = 'scoped memory for tpu_custom_call.1']
    #allocation13 [shape = 'u8[65536]{0}', space=vmem, size = 0x10000, scoped, tag = 'output window, operand 0, single buffered']
    %16 = vsyncpa [#allocation3], 0
    %17 = vsyncpa [#allocation6], 0
    %18 = vsyncpa [#allocation9], 0
    %19 = vsyncpa [#allocation12], 0
    %20 = vsyncpa [#allocation4], 0
    // Predicated region
    $region2: #{tpu_custom_call.1} parent=1 // pred_check
      _
    $region3: #{tpu_custom_call.1} parent=1 // pred_check_branch
      %22 = sbr.rel (0) target = $region5
    $region4: #{tpu_custom_call.1} parent=1 // pred_region
      _
    $region5: #{tpu_custom_call.1} parent=1 // pred_fallthru
      _
    // Predicated region
    $region6: #{tpu_custom_call.1} parent=1 // pred_check
      _
    $region7: #{tpu_custom_call.1} parent=1 // pred_check_branch
      %24 = sbr.rel (0) target = $region9
    $region8: #{tpu_custom_call.1} parent=1 // pred_region
      %s26 = ssub.s32 128, 128
      %27 = vsyncadd [#allocation3], %s26
      %s28 = sshll.u32 [#allocation2], 4
      %s29 = int_to_ptr.vmem [resolvable:$true] %s28
      %34 = dma.hbm_to_vmem [thread:$0]  %s1, 128, %s29, [#allocation3], 64, 64, 4
    $region9: #{tpu_custom_call.1} parent=1 // pred_fallthru
      _
    // Predicated region
    $region10: #{tpu_custom_call.1} parent=1 // pred_check
      _
    $region11: #{tpu_custom_call.1} parent=1 // pred_check_branch
      %36 = sbr.rel (0) target = $region13
    $region12: #{tpu_custom_call.1} parent=1 // pred_region
      %s38 = ssub.s32 16, 16
      %39 = vsyncadd [#allocation6], %s38
      %s41 = sshll.u32 [#allocation5], 4
      %s42 = int_to_ptr.vmem [resolvable:$true] %s41
      %44 = dma.hbm_to_vmem [thread:$0]  %s2, 16, %s42, [#allocation6]
    $region13: #{tpu_custom_call.1} parent=1 // pred_fallthru
      _
    // Predicated region
    $region14: #{tpu_custom_call.1} parent=1 // pred_check
      _
    $region15: #{tpu_custom_call.1} parent=1 // pred_check_branch
      %46 = sbr.rel (0) target = $region17
    $region16: #{tpu_custom_call.1} parent=1 // pred_region
      %s48 = ssub.s32 2048, 2048
      %49 = vsyncadd [#allocation6], %s48
      %s50 = sshll.u32 [#allocation7], 4
      %s51 = int_to_ptr.vmem [resolvable:$true] %s50
      %56 = dma.hbm_to_vmem [thread:$0]  %s3, 2048, %s51, [#allocation6], 128, 128, 8
    $region17: #{tpu_custom_call.1} parent=1 // pred_fallthru
      _
    // Predicated region
    $region18: #{tpu_custom_call.1} parent=1 // pred_check
      _
    $region19: #{tpu_custom_call.1} parent=1 // pred_check_branch
      %58 = sbr.rel (0) target = $region21
    $region20: #{tpu_custom_call.1} parent=1 // pred_region
      _
    $region21: #{tpu_custom_call.1} parent=1 // pred_fallthru
      _
    // Predicated region
    $region22: #{tpu_custom_call.1} parent=1 // pred_check
      _
    $region23: #{tpu_custom_call.1} parent=1 // pred_check_branch
      %60 = sbr.rel (0) target = $region25
    $region24: #{tpu_custom_call.1} parent=1 // pred_region
      _
    $region25: #{tpu_custom_call.1} parent=1 // pred_fallthru
      _
    // Predicated region
    $region26: #{tpu_custom_call.1} parent=1 // pred_check
      _
    $region27: #{tpu_custom_call.1} parent=1 // pred_check_branch
      %62 = sbr.rel (0) target = $region29
    $region28: #{tpu_custom_call.1} parent=1 // pred_region
      %s64 = ssub.s32 32, 32
      %65 = vsyncadd [#allocation9], %s64
      %s67 = sshll.u32 [#allocation8], 4
      %s68 = int_to_ptr.vmem [resolvable:$true] %s67
      %70 = dma.hbm_to_vmem [thread:$0]  %s6, 32, %s68, [#allocation9]
    $region29: #{tpu_custom_call.1} parent=1 // pred_fallthru
      _
    // Predicated region
    $region30: #{tpu_custom_call.1} parent=1 // pred_check
      _
    $region31: #{tpu_custom_call.1} parent=1 // pred_check_branch
      %72 = sbr.rel (0) target = $region33
    $region32: #{tpu_custom_call.1} parent=1 // pred_region
      %s74 = ssub.s32 2048, 2048
      %75 = vsyncadd [#allocation9], %s74
      %s76 = sshll.u32 [#allocation10], 4
      %s77 = int_to_ptr.vmem [resolvable:$true] %s76
      %82 = dma.hbm_to_vmem [thread:$0]  %s7, 2048, %s77, [#allocation9], 64, 64, 4
    $region33: #{tpu_custom_call.1} parent=1 // pred_fallthru
      _
    // Predicated region
    $region34: #{tpu_custom_call.1} parent=1 // pred_check
      _
    $region35: #{tpu_custom_call.1} parent=1 // pred_check_branch
      %84 = sbr.rel (0) target = $region37
    $region36: #{tpu_custom_call.1} parent=1 // pred_region
      %s86 = ssub.s32 16, 16
      %87 = vsyncadd [#allocation12], %s86
      %s89 = sshll.u32 [#allocation11], 4
      %s90 = int_to_ptr.vmem [resolvable:$true] %s89
      %92 = dma.hbm_to_vmem [thread:$0]  %s8, 16, %s90, [#allocation12]
    $region37: #{tpu_custom_call.1} parent=1 // pred_fallthru
      _
    // Predicated region
    $region38: #{tpu_custom_call.1} parent=1 // pred_check
      _
    $region39: #{tpu_custom_call.1} parent=1 // pred_check_branch
      %94 = sbr.rel (0) target = $region41
    $region40: #{tpu_custom_call.1} parent=1 // pred_region
      _
    $region41: #{tpu_custom_call.1} parent=1 // pred_fallthru
      _
    // Predicated region
    $region42: #{tpu_custom_call.1} parent=1 // pred_check
      _
    $region43: #{tpu_custom_call.1} parent=1 // pred_check_branch
      %96 = sbr.rel (0) target = $region45
    $region44: #{tpu_custom_call.1} parent=1 // pred_region
      _
    $region45: #{tpu_custom_call.1} parent=1 // pred_fallthru
      _
    // Predicated region
    $region46: #{tpu_custom_call.1} parent=1 // pred_check
      _
    $region47: #{tpu_custom_call.1} parent=1 // pred_check_branch
      %98 = sbr.rel (0) target = $region49
    $region48: #{tpu_custom_call.1} parent=1 // pred_region
      %99 = dma.done [#allocation3], 128
    $region49: #{tpu_custom_call.1} parent=1 // pred_fallthru
      _
    // Predicated region
    $region50: #{tpu_custom_call.1} parent=1 // pred_check
      _
    $region51: #{tpu_custom_call.1} parent=1 // pred_check_branch
      %101 = sbr.rel (0) target = $region53
    $region52: #{tpu_custom_call.1} parent=1 // pred_region
      %102 = dma.done [#allocation6], 16
    $region53: #{tpu_custom_call.1} parent=1 // pred_fallthru
      _
    // Predicated region
    $region54: #{tpu_custom_call.1} parent=1 // pred_check
      _
    $region55: #{tpu_custom_call.1} parent=1 // pred_check_branch
      %104 = sbr.rel (0) target = $region57
    $region56: #{tpu_custom_call.1} parent=1 // pred_region
      %105 = dma.done [#allocation6], 2048
    $region57: #{tpu_custom_call.1} parent=1 // pred_fallthru
      _
    // Predicated region
    $region58: #{tpu_custom_call.1} parent=1 // pred_check
      _
    $region59: #{tpu_custom_call.1} parent=1 // pred_check_branch
      %107 = sbr.rel (0) target = $region61
    $region60: #{tpu_custom_call.1} parent=1 // pred_region
      %108 = dma.done [#allocation9], 32
    $region61: #{tpu_custom_call.1} parent=1 // pred_fallthru
      _
    // Predicated region
    $region62: #{tpu_custom_call.1} parent=1 // pred_check
      _
    $region63: #{tpu_custom_call.1} parent=1 // pred_check_branch
      %110 = sbr.rel (0) target = $region65
    $region64: #{tpu_custom_call.1} parent=1 // pred_region
      %111 = dma.done [#allocation9], 2048
    $region65: #{tpu_custom_call.1} parent=1 // pred_fallthru
      _
    // Predicated region
    $region66: #{tpu_custom_call.1} parent=1 // pred_check
      _
    $region67: #{tpu_custom_call.1} parent=1 // pred_check_branch
      %113 = sbr.rel (0) target = $region69
    $region68: #{tpu_custom_call.1} parent=1 // pred_region
      %114 = dma.done [#allocation12], 16
    $region69: #{tpu_custom_call.1} parent=1 // pred_fallthru
      _
    %v116 = vld [vmem:[%s0] sm:$0xff]
    %v117 = vld [vmem:[%s0 + $0x8] sm:$0xff]
    %v118 = vld [vmem:[%s0 + $0x10] sm:$0xff]
    %v119 = vld [vmem:[%s0 + $0x18] sm:$0xff]
    %v120 = vld [vmem:[%s0 + $0x20] sm:$0xff]
    %v121 = vld [vmem:[%s0 + $0x28] sm:$0xff]
    %v122 = vld [vmem:[%s0 + $0x30] sm:$0xff]
    %v123 = vld [vmem:[%s0 + $0x38] sm:$0xff]
    %v124 = vld [vmem:[%s0 + $0x40] sm:$0xff]
    %v125 = vld [vmem:[%s0 + $0x48] sm:$0xff]
    %v126 = vld [vmem:[%s0 + $0x50] sm:$0xff]
    %v127 = vld [vmem:[%s0 + $0x58] sm:$0xff]
    %v128 = vld [vmem:[%s0 + $0x60] sm:$0xff]
    %v129 = vld [vmem:[%s0 + $0x68] sm:$0xff]
    %v130 = vld [vmem:[%s0 + $0x70] sm:$0xff]
    %v131 = vld [vmem:[%s0 + $0x78] sm:$0xff]
    %v132 = vld [vmem:[%s0 + $0x80] sm:$0xff]
    %v133 = vld [vmem:[%s0 + $0x88] sm:$0xff]
    %v134 = vld [vmem:[%s0 + $0x90] sm:$0xff]
    %v135 = vld [vmem:[%s0 + $0x98] sm:$0xff]
    %v136 = vld [vmem:[%s0 + $0xa0] sm:$0xff]
    %v137 = vld [vmem:[%s0 + $0xa8] sm:$0xff]
    %v138 = vld [vmem:[%s0 + $0xb0] sm:$0xff]
    %v139 = vld [vmem:[%s0 + $0xb8] sm:$0xff]
    %v140 = vld [vmem:[%s0 + $0xc0] sm:$0xff]
    %v141 = vld [vmem:[%s0 + $0xc8] sm:$0xff]
    %v142 = vld [vmem:[%s0 + $0xd0] sm:$0xff]
    %v143 = vld [vmem:[%s0 + $0xd8] sm:$0xff]
    %v144 = vld [vmem:[%s0 + $0xe0] sm:$0xff]
    %v145 = vld [vmem:[%s0 + $0xe8] sm:$0xff]
    %v146 = vld [vmem:[%s0 + $0xf0] sm:$0xff]
    %v147 = vld [vmem:[%s0 + $0xf8] sm:$0xff]
    %v148 = vpack.c.bf16 %v117, %v116
    %v149 = vpack.c.bf16 %v119, %v118
    %v150 = vpack.c.bf16 %v121, %v120
    %v151 = vpack.c.bf16 %v123, %v122
    %v152 = vpack.c.bf16 %v125, %v124
    %v153 = vpack.c.bf16 %v127, %v126
    %v154 = vpack.c.bf16 %v129, %v128
    %v155 = vpack.c.bf16 %v131, %v130
    %v156 = vpack.c.bf16 %v133, %v132
    %v157 = vpack.c.bf16 %v135, %v134
    %v158 = vpack.c.bf16 %v137, %v136
    %v159 = vpack.c.bf16 %v139, %v138
    %v160 = vpack.c.bf16 %v141, %v140
    %v161 = vpack.c.bf16 %v143, %v142
    %v162 = vpack.c.bf16 %v145, %v144
    %v163 = vpack.c.bf16 %v147, %v146
    %v164 = vld [vmem:[#allocation2] sm:$0xf]
    %v165 = vld [vmem:[#allocation2 + $0x4] sm:$0xf]
    %v166 = vld [vmem:[#allocation5] sm:$0x1]
    %v168 = vlaneseq
    %v169 = vshrl.u32 %v168, 7
    %v170 = vsub.s32 0, %v169
    %v171 = vrot.slane %v166, %v170
    %v175 = vunpack.c.l.b16 %v164
    %v176 = vunpack.c.l.b16 %v165
    %v177 = vpack.c.b16 %v176, %v175
    %vm178 = vcmask 121856
    %v180 = vsel %vm178, %v148, 0
    %v183 = vsel %vm178, %v149, 0
    %v186 = vsel %vm178, %v150, 0
    %v189 = vsel %vm178, %v151, 0
    %v192 = vsel %vm178, %v152, 0
    %v195 = vsel %vm178, %v153, 0
    %v198 = vsel %vm178, %v154, 0
    %v201 = vsel %vm178, %v155, 0
    %v204 = vsel %vm178, %v156, 0
    %v207 = vsel %vm178, %v157, 0
    %v210 = vsel %vm178, %v158, 0
    %v213 = vsel %vm178, %v159, 0
    %v216 = vsel %vm178, %v160, 0
    %v219 = vsel %vm178, %v161, 0
    %v222 = vsel %vm178, %v162, 0
    %v225 = vsel %vm178, %v163, 0
    %vm227 = vcmask 1046528
    %vm228 = vcmask 1047552
    %v229 = vsel %vm227, 4294967295, 65535
    %v230 = vsel %vm228, %v229, 0
    %v232 = vand.u32 %v177, %v230
    %234 = vmatprep.subr.bf16.mxu0 0
    %235 = vmatpush1.bf16.msra.mxu0 %v232
    %236 = vmatprep.subr.bf16.mxu0 0
    %237 = vmatpush1.bf16.msra.mxu0 0
    %238 = vmatprep.subr.bf16.mxu0 0
    %239 = vmatpush1.bf16.msra.mxu0 0
    %240 = vmatprep.subr.bf16.mxu0 0
    %241 = vmatpush1.bf16.msra.mxu0 0
    %242 = vmatprep.subr.bf16.mxu0 0
    %243 = vmatpush1.bf16.msra.mxu0 0
    %244 = vmatprep.subr.bf16.mxu0 0
    %245 = vmatpush1.bf16.msra.mxu0 0
    %246 = vmatprep.subr.bf16.mxu0 0
    %247 = vmatpush1.bf16.msra.mxu0 0
    %248 = vmatprep.subr.bf16.mxu0 0
    %249 = vmatpush1.bf16.msra.mxu0 0
    %250 = vmatprep.subr.bf16.mxu0 0
    %251 = vmatpush1.bf16.msra.mxu0 0
    %252 = vmatprep.subr.bf16.mxu0 0
    %253 = vmatpush1.bf16.msra.mxu0 0
    %254 = vmatprep.subr.bf16.mxu0 0
    %255 = vmatpush1.bf16.msra.mxu0 0
    %256 = vmatprep.subr.bf16.mxu0 0
    %257 = vmatpush1.bf16.msra.mxu0 0
    %258 = vmatprep.subr.bf16.mxu0 0
    %259 = vmatpush1.bf16.msra.mxu0 0
    %260 = vmatprep.subr.bf16.mxu0 0
    %261 = vmatpush1.bf16.msra.mxu0 0
    %262 = vmatprep.subr.bf16.mxu0 0
    %263 = vmatpush1.bf16.msra.mxu0 0
    %264 = vmatprep.subr.bf16.mxu0 0
    %265 = vmatpush1.bf16.msra.mxu0 0
    %266 = vmatprep.mubr.bf16.mxu0 0
    %267 = vmatmul.mubr.bf16.gmra.mrb[0].mxu0 %v180
    %v268 = vpop.f32.mrb[0].mxu0
    %v269 = vadd.f32 %v171, %v268
    %v270 = vpop.f32.mrb[0].mxu0
    %v271 = vpop.f32.mrb[0].mxu0
    %v272 = vadd.f32 %v171, %v271
    %v273 = vpop.f32.mrb[0].mxu0
    %274 = vmatprep.mubr.bf16.mxu0 0
    %275 = vmatmul.mubr.bf16.gmra.mrb[0].mxu0 %v183
    %v276 = vpop.f32.mrb[0].mxu0
    %v277 = vadd.f32 %v171, %v276
    %v278 = vpop.f32.mrb[0].mxu0
    %v279 = vpop.f32.mrb[0].mxu0
    %v280 = vadd.f32 %v171, %v279
    %v281 = vpop.f32.mrb[0].mxu0
    %282 = vmatprep.mubr.bf16.mxu0 0
    %283 = vmatmul.mubr.bf16.gmra.mrb[0].mxu0 %v186
    %v284 = vpop.f32.mrb[0].mxu0
    %v285 = vadd.f32 %v171, %v284
    %v286 = vpop.f32.mrb[0].mxu0
    %v287 = vpop.f32.mrb[0].mxu0
    %v288 = vadd.f32 %v171, %v287
    %v289 = vpop.f32.mrb[0].mxu0
    %290 = vmatprep.mubr.bf16.mxu0 0
    %291 = vmatmul.mubr.bf16.gmra.mrb[0].mxu0 %v189
    %v292 = vpop.f32.mrb[0].mxu0
    %v293 = vadd.f32 %v171, %v292
    %v294 = vpop.f32.mrb[0].mxu0
    %v295 = vpop.f32.mrb[0].mxu0
    %v296 = vadd.f32 %v171, %v295
    %v297 = vpop.f32.mrb[0].mxu0
    %298 = vmatprep.mubr.bf16.mxu0 0
    %299 = vmatmul.mubr.bf16.gmra.mrb[0].mxu0 %v192
    %v300 = vpop.f32.mrb[0].mxu0
    %v301 = vadd.f32 %v171, %v300
    %v302 = vpop.f32.mrb[0].mxu0
    %v303 = vpop.f32.mrb[0].mxu0
    %v304 = vadd.f32 %v171, %v303
    %v305 = vpop.f32.mrb[0].mxu0
    %306 = vmatprep.mubr.bf16.mxu0 0
    %307 = vmatmul.mubr.bf16.gmra.mrb[0].mxu0 %v195
    %v308 = vpop.f32.mrb[0].mxu0
    %v309 = vadd.f32 %v171, %v308
    %v310 = vpop.f32.mrb[0].mxu0
    %v311 = vpop.f32.mrb[0].mxu0
    %v312 = vadd.f32 %v171, %v311
    %v313 = vpop.f32.mrb[0].mxu0
    %314 = vmatprep.mubr.bf16.mxu0 0
    %315 = vmatmul.mubr.bf16.gmra.mrb[0].mxu0 %v198
    %v316 = vpop.f32.mrb[0].mxu0
    %v317 = vadd.f32 %v171, %v316
    %v318 = vpop.f32.mrb[0].mxu0
    %v319 = vpop.f32.mrb[0].mxu0
    %v320 = vadd.f32 %v171, %v319
    %v321 = vpop.f32.mrb[0].mxu0
    %322 = vmatprep.mubr.bf16.mxu0 0
    %323 = vmatmul.mubr.bf16.gmra.mrb[0].mxu0 %v201
    %v324 = vpop.f32.mrb[0].mxu0
    %v325 = vadd.f32 %v171, %v324
    %v326 = vpop.f32.mrb[0].mxu0
    %v327 = vpop.f32.mrb[0].mxu0
    %v328 = vadd.f32 %v171, %v327
    %v329 = vpop.f32.mrb[0].mxu0
    %330 = vmatprep.mubr.bf16.mxu0 0
    %331 = vmatmul.mubr.bf16.gmra.mrb[0].mxu0 %v204
    %v332 = vpop.f32.mrb[0].mxu0
    %v333 = vadd.f32 %v171, %v332
    %v334 = vpop.f32.mrb[0].mxu0
    %v335 = vpop.f32.mrb[0].mxu0
    %v336 = vadd.f32 %v171, %v335
    %v337 = vpop.f32.mrb[0].mxu0
    %338 = vmatprep.mubr.bf16.mxu0 0
    %339 = vmatmul.mubr.bf16.gmra.mrb[0].mxu0 %v207
    %v340 = vpop.f32.mrb[0].mxu0
    %v341 = vadd.f32 %v171, %v340
    %v342 = vpop.f32.mrb[0].mxu0
    %v343 = vpop.f32.mrb[0].mxu0
    %v344 = vadd.f32 %v171, %v343
    %v345 = vpop.f32.mrb[0].mxu0
    %346 = vmatprep.mubr.bf16.mxu0 0
    %347 = vmatmul.mubr.bf16.gmra.mrb[0].mxu0 %v210
    %v348 = vpop.f32.mrb[0].mxu0
    %v349 = vadd.f32 %v171, %v348
    %v350 = vpop.f32.mrb[0].mxu0
    %v351 = vpop.f32.mrb[0].mxu0
    %v352 = vadd.f32 %v171, %v351
    %v353 = vpop.f32.mrb[0].mxu0
    %354 = vmatprep.mubr.bf16.mxu0 0
    %355 = vmatmul.mubr.bf16.gmra.mrb[0].mxu0 %v213
    %v356 = vpop.f32.mrb[0].mxu0
    %v357 = vadd.f32 %v171, %v356
    %v358 = vpop.f32.mrb[0].mxu0
    %v359 = vpop.f32.mrb[0].mxu0
    %v360 = vadd.f32 %v171, %v359
    %v361 = vpop.f32.mrb[0].mxu0
    %362 = vmatprep.mubr.bf16.mxu0 0
    %363 = vmatmul.mubr.bf16.gmra.mrb[0].mxu0 %v216
    %v364 = vpop.f32.mrb[0].mxu0
    %v365 = vadd.f32 %v171, %v364
    %v366 = vpop.f32.mrb[0].mxu0
    %v367 = vpop.f32.mrb[0].mxu0
    %v368 = vadd.f32 %v171, %v367
    %v369 = vpop.f32.mrb[0].mxu0
    %370 = vmatprep.mubr.bf16.mxu0 0
    %371 = vmatmul.mubr.bf16.gmra.mrb[0].mxu0 %v219
    %v372 = vpop.f32.mrb[0].mxu0
    %v373 = vadd.f32 %v171, %v372
    %v374 = vpop.f32.mrb[0].mxu0
    %v375 = vpop.f32.mrb[0].mxu0
    %v376 = vadd.f32 %v171, %v375
    %v377 = vpop.f32.mrb[0].mxu0
    %378 = vmatprep.mubr.bf16.mxu0 0
    %379 = vmatmul.mubr.bf16.gmra.mrb[0].mxu0 %v222
    %v380 = vpop.f32.mrb[0].mxu0
    %v381 = vadd.f32 %v171, %v380
    %v382 = vpop.f32.mrb[0].mxu0
    %v383 = vpop.f32.mrb[0].mxu0
    %v384 = vadd.f32 %v171, %v383
    %v385 = vpop.f32.mrb[0].mxu0
    %386 = vmatprep.mubr.bf16.mxu0 0
    %387 = vmatmul.mubr.bf16.gmra.mrb[0].mxu0 %v225
    %v388 = vpop.f32.mrb[0].mxu0
    %v389 = vadd.f32 %v171, %v388
    %v390 = vpop.f32.mrb[0].mxu0
    %v391 = vpop.f32.mrb[0].mxu0
    %v392 = vadd.f32 %v171, %v391
    %v393 = vpop.f32.mrb[0].mxu0
    %394 = vdwg.mxu0
    %v395 = vmax.f32 %v269, 0.0
    %v396 = vmax.f32 %v272, 0.0
    %v397 = vmax.f32 %v277, 0.0
    %v398 = vmax.f32 %v280, 0.0
    %v399 = vmax.f32 %v285, 0.0
    %v400 = vmax.f32 %v288, 0.0
    %v401 = vmax.f32 %v293, 0.0
    %v402 = vmax.f32 %v296, 0.0
    %v403 = vmax.f32 %v301, 0.0
    %v404 = vmax.f32 %v304, 0.0
    %v405 = vmax.f32 %v309, 0.0
    %v406 = vmax.f32 %v312, 0.0
    %v407 = vmax.f32 %v317, 0.0
    %v408 = vmax.f32 %v320, 0.0
    %v409 = vmax.f32 %v325, 0.0
    %v410 = vmax.f32 %v328, 0.0
    %v411 = vmax.f32 %v333, 0.0
    %v412 = vmax.f32 %v336, 0.0
    %v413 = vmax.f32 %v341, 0.0
    %v414 = vmax.f32 %v344, 0.0
    %v415 = vmax.f32 %v349, 0.0
    %v416 = vmax.f32 %v352, 0.0
    %v417 = vmax.f32 %v357, 0.0
    %v418 = vmax.f32 %v360, 0.0
    %v419 = vmax.f32 %v365, 0.0
    %v420 = vmax.f32 %v368, 0.0
    %v421 = vmax.f32 %v373, 0.0
    %v422 = vmax.f32 %v376, 0.0
    %v423 = vmax.f32 %v381, 0.0
    %v424 = vmax.f32 %v384, 0.0
    %v425 = vmax.f32 %v389, 0.0
    %v426 = vmax.f32 %v392, 0.0
    %v427 = vpack.c.bf16 %v396, %v395
    %v428 = vpack.c.bf16 %v398, %v397
    %v429 = vpack.c.bf16 %v400, %v399
    %v430 = vpack.c.bf16 %v402, %v401
    %v431 = vpack.c.bf16 %v404, %v403
    %v432 = vpack.c.bf16 %v406, %v405
    %v433 = vpack.c.bf16 %v408, %v407
    %v434 = vpack.c.bf16 %v410, %v409
    %v435 = vpack.c.bf16 %v412, %v411
    %v436 = vpack.c.bf16 %v414, %v413
    %v437 = vpack.c.bf16 %v416, %v415
    %v438 = vpack.c.bf16 %v418, %v417
    %v439 = vpack.c.bf16 %v420, %v419
    %v440 = vpack.c.bf16 %v422, %v421
    %v441 = vpack.c.bf16 %v424, %v423
    %v442 = vpack.c.bf16 %v426, %v425
    %v443 = vld [vmem:[#allocation7] sm:$0xff]
    %v444 = vld [vmem:[#allocation7 + $0x8] sm:$0xff]
    %v445 = vld [vmem:[#allocation7 + $0x10] sm:$0xff]
    %v446 = vld [vmem:[#allocation7 + $0x18] sm:$0xff]
    %v447 = vld [vmem:[#allocation7 + $0x20] sm:$0xff]
    %v448 = vld [vmem:[#allocation7 + $0x28] sm:$0xff]
    %v449 = vld [vmem:[#allocation7 + $0x30] sm:$0xff]
    %v450 = vld [vmem:[#allocation7 + $0x38] sm:$0xff]
    %v451 = vld [vmem:[#allocation7 + $0x40] sm:$0xff]
    %v452 = vld [vmem:[#allocation7 + $0x48] sm:$0xff]
    %v453 = vld [vmem:[#allocation7 + $0x50] sm:$0xff]
    %v454 = vld [vmem:[#allocation7 + $0x58] sm:$0xff]
    %v455 = vld [vmem:[#allocation7 + $0x60] sm:$0xff]
    %v456 = vld [vmem:[#allocation7 + $0x68] sm:$0xff]
    %v457 = vld [vmem:[#allocation7 + $0x70] sm:$0xff]
    %v458 = vld [vmem:[#allocation7 + $0x78] sm:$0xff]
    %v459 = vld [vmem:[%s4] sm:$0x3]
    %v461 = vlaneseq
    %v462 = vshrl.u32 %v461, 7
    %v463 = vsub.s32 0, %v462
    %v464 = vrot.slane %v459, %v463
    %v465 = vlaneseq
    %v466 = vshrl.u32 %v465, 7
    %v467 = vsub.s32 1, %v466
    %v468 = vrot.slane %v459, %v467
    %v487 = vunpack.c.l.b16 %v443
    %v488 = vunpack.c.h.b16 %v443
    %v489 = vunpack.c.l.b16 %v444
    %v490 = vunpack.c.h.b16 %v444
    %v491 = vunpack.c.l.b16 %v445
    %v492 = vunpack.c.h.b16 %v445
    %v493 = vunpack.c.l.b16 %v446
    %v494 = vunpack.c.h.b16 %v446
    %v495 = vunpack.c.l.b16 %v447
    %v496 = vunpack.c.h.b16 %v447
    %v497 = vunpack.c.l.b16 %v448
    %v498 = vunpack.c.h.b16 %v448
    %v499 = vunpack.c.l.b16 %v449
    %v500 = vunpack.c.h.b16 %v449
    %v501 = vunpack.c.l.b16 %v450
    %v502 = vunpack.c.h.b16 %v450
    %v503 = vunpack.c.l.b16 %v451
    %v504 = vunpack.c.h.b16 %v451
    %v505 = vunpack.c.l.b16 %v452
    %v506 = vunpack.c.h.b16 %v452
    %v507 = vunpack.c.l.b16 %v453
    %v508 = vunpack.c.h.b16 %v453
    %v509 = vunpack.c.l.b16 %v454
    %v510 = vunpack.c.h.b16 %v454
    %v511 = vunpack.c.l.b16 %v455
    %v512 = vunpack.c.h.b16 %v455
    %v513 = vunpack.c.l.b16 %v456
    %v514 = vunpack.c.h.b16 %v456
    %v515 = vunpack.c.l.b16 %v457
    %v516 = vunpack.c.h.b16 %v457
    %v517 = vunpack.c.l.b16 %v458
    %v518 = vunpack.c.h.b16 %v458
    %v519 = vpack.c.b16 %v489, %v487
    %v520 = vpack.c.b16 %v490, %v488
    %v521 = vpack.c.b16 %v493, %v491
    %v522 = vpack.c.b16 %v494, %v492
    %v523 = vpack.c.b16 %v497, %v495
    %v524 = vpack.c.b16 %v498, %v496
    %v525 = vpack.c.b16 %v501, %v499
    %v526 = vpack.c.b16 %v502, %v500
    %v527 = vpack.c.b16 %v505, %v503
    %v528 = vpack.c.b16 %v506, %v504
    %v529 = vpack.c.b16 %v509, %v507
    %v530 = vpack.c.b16 %v510, %v508
    %v531 = vpack.c.b16 %v513, %v511
    %v532 = vpack.c.b16 %v514, %v512
    %v533 = vpack.c.b16 %v517, %v515
    %v534 = vpack.c.b16 %v518, %v516
    %551 = vmatprep.subr.bf16.mxu0 %v520
    %552 = vmatpush1.bf16.msra.mxu0 %v519
    %553 = vmatprep.subr.bf16.mxu0 %v522
    %554 = vmatpush1.bf16.msra.mxu0 %v521
    %555 = vmatprep.subr.bf16.mxu0 %v524
    %556 = vmatpush1.bf16.msra.mxu0 %v523
    %557 = vmatprep.subr.bf16.mxu0 %v526
    %558 = vmatpush1.bf16.msra.mxu0 %v525
    %559 = vmatprep.subr.bf16.mxu0 %v528
    %560 = vmatpush1.bf16.msra.mxu0 %v527
    %561 = vmatprep.subr.bf16.mxu0 %v530
    %562 = vmatpush1.bf16.msra.mxu0 %v529
    %563 = vmatprep.subr.bf16.mxu0 %v532
    %564 = vmatpush1.bf16.msra.mxu0 %v531
    %565 = vmatprep.subr.bf16.mxu0 %v534
    %566 = vmatpush1.bf16.msra.mxu0 %v533
    %567 = vmatprep.subr.bf16.mxu0 0
    %568 = vmatpush1.bf16.msra.mxu0 0
    %569 = vmatprep.subr.bf16.mxu0 0
    %570 = vmatpush1.bf16.msra.mxu0 0
    %571 = vmatprep.subr.bf16.mxu0 0
    %572 = vmatpush1.bf16.msra.mxu0 0
    %573 = vmatprep.subr.bf16.mxu0 0
    %574 = vmatpush1.bf16.msra.mxu0 0
    %575 = vmatprep.subr.bf16.mxu0 0
    %576 = vmatpush1.bf16.msra.mxu0 0
    %577 = vmatprep.subr.bf16.mxu0 0
    %578 = vmatpush1.bf16.msra.mxu0 0
    %579 = vmatprep.subr.bf16.mxu0 0
    %580 = vmatpush1.bf16.msra.mxu0 0
    %581 = vmatprep.subr.bf16.mxu0 0
    %582 = vmatpush1.bf16.msra.mxu0 0
    %583 = vmatprep.mubr.bf16.mxu0 0
    %584 = vmatmul.mubr.bf16.gmra.mrb[0].mxu0 %v427
    %v585 = vpop.f32.mrb[0].mxu0
    %v586 = vadd.f32 %v464, %v585
    %v587 = vpop.f32.mrb[0].mxu0
    %v588 = vadd.f32 %v468, %v587
    %v589 = vpop.f32.mrb[0].mxu0
    %v590 = vadd.f32 %v464, %v589
    %v591 = vpop.f32.mrb[0].mxu0
    %v592 = vadd.f32 %v468, %v591
    %593 = vmatprep.mubr.bf16.mxu0 0
    %594 = vmatmul.mubr.bf16.gmra.mrb[0].mxu0 %v428
    %v595 = vpop.f32.mrb[0].mxu0
    %v596 = vadd.f32 %v464, %v595
    %v597 = vpop.f32.mrb[0].mxu0
    %v598 = vadd.f32 %v468, %v597
    %v599 = vpop.f32.mrb[0].mxu0
    %v600 = vadd.f32 %v464, %v599
    %v601 = vpop.f32.mrb[0].mxu0
    %v602 = vadd.f32 %v468, %v601
    %603 = vmatprep.mubr.bf16.mxu0 0
    %604 = vmatmul.mubr.bf16.gmra.mrb[0].mxu0 %v429
    %v605 = vpop.f32.mrb[0].mxu0
    %v606 = vadd.f32 %v464, %v605
    %v607 = vpop.f32.mrb[0].mxu0
    %v608 = vadd.f32 %v468, %v607
    %v609 = vpop.f32.mrb[0].mxu0
    %v610 = vadd.f32 %v464, %v609
    %v611 = vpop.f32.mrb[0].mxu0
    %v612 = vadd.f32 %v468, %v611
    %613 = vmatprep.mubr.bf16.mxu0 0
    %614 = vmatmul.mubr.bf16.gmra.mrb[0].mxu0 %v430
    %v615 = vpop.f32.mrb[0].mxu0
    %v616 = vadd.f32 %v464, %v615
    %v617 = vpop.f32.mrb[0].mxu0
    %v618 = vadd.f32 %v468, %v617
    %v619 = vpop.f32.mrb[0].mxu0
    %v620 = vadd.f32 %v464, %v619
    %v621 = vpop.f32.mrb[0].mxu0
    %v622 = vadd.f32 %v468, %v621
    %623 = vmatprep.mubr.bf16.mxu0 0
    %624 = vmatmul.mubr.bf16.gmra.mrb[0].mxu0 %v431
    %v625 = vpop.f32.mrb[0].mxu0
    %v626 = vadd.f32 %v464, %v625
    %v627 = vpop.f32.mrb[0].mxu0
    %v628 = vadd.f32 %v468, %v627
    %v629 = vpop.f32.mrb[0].mxu0
    %v630 = vadd.f32 %v464, %v629
    %v631 = vpop.f32.mrb[0].mxu0
    %v632 = vadd.f32 %v468, %v631
    %633 = vmatprep.mubr.bf16.mxu0 0
    %634 = vmatmul.mubr.bf16.gmra.mrb[0].mxu0 %v432
    %v635 = vpop.f32.mrb[0].mxu0
    %v636 = vadd.f32 %v464, %v635
    %v637 = vpop.f32.mrb[0].mxu0
    %v638 = vadd.f32 %v468, %v637
    %v639 = vpop.f32.mrb[0].mxu0
    %v640 = vadd.f32 %v464, %v639
    %v641 = vpop.f32.mrb[0].mxu0
    %v642 = vadd.f32 %v468, %v641
    %643 = vmatprep.mubr.bf16.mxu0 0
    %644 = vmatmul.mubr.bf16.gmra.mrb[0].mxu0 %v433
    %v645 = vpop.f32.mrb[0].mxu0
    %v646 = vadd.f32 %v464, %v645
    %v647 = vpop.f32.mrb[0].mxu0
    %v648 = vadd.f32 %v468, %v647
    %v649 = vpop.f32.mrb[0].mxu0
    %v650 = vadd.f32 %v464, %v649
    %v651 = vpop.f32.mrb[0].mxu0
    %v652 = vadd.f32 %v468, %v651
    %653 = vmatprep.mubr.bf16.mxu0 0
    %654 = vmatmul.mubr.bf16.gmra.mrb[0].mxu0 %v434
    %v655 = vpop.f32.mrb[0].mxu0
    %v656 = vadd.f32 %v464, %v655
    %v657 = vpop.f32.mrb[0].mxu0
    %v658 = vadd.f32 %v468, %v657
    %v659 = vpop.f32.mrb[0].mxu0
    %v660 = vadd.f32 %v464, %v659
    %v661 = vpop.f32.mrb[0].mxu0
    %v662 = vadd.f32 %v468, %v661
    %663 = vmatprep.mubr.bf16.mxu0 0
    %664 = vmatmul.mubr.bf16.gmra.mrb[0].mxu0 %v435
    %v665 = vpop.f32.mrb[0].mxu0
    %v666 = vadd.f32 %v464, %v665
    %v667 = vpop.f32.mrb[0].mxu0
    %v668 = vadd.f32 %v468, %v667
    %v669 = vpop.f32.mrb[0].mxu0
    %v670 = vadd.f32 %v464, %v669
    %v671 = vpop.f32.mrb[0].mxu0
    %v672 = vadd.f32 %v468, %v671
    %673 = vmatprep.mubr.bf16.mxu0 0
    %674 = vmatmul.mubr.bf16.gmra.mrb[0].mxu0 %v436
    %v675 = vpop.f32.mrb[0].mxu0
    %v676 = vadd.f32 %v464, %v675
    %v677 = vpop.f32.mrb[0].mxu0
    %v678 = vadd.f32 %v468, %v677
    %v679 = vpop.f32.mrb[0].mxu0
    %v680 = vadd.f32 %v464, %v679
    %v681 = vpop.f32.mrb[0].mxu0
    %v682 = vadd.f32 %v468, %v681
    %683 = vmatprep.mubr.bf16.mxu0 0
    %684 = vmatmul.mubr.bf16.gmra.mrb[0].mxu0 %v437
    %v685 = vpop.f32.mrb[0].mxu0
    %v686 = vadd.f32 %v464, %v685
    %v687 = vpop.f32.mrb[0].mxu0
    %v688 = vadd.f32 %v468, %v687
    %v689 = vpop.f32.mrb[0].mxu0
    %v690 = vadd.f32 %v464, %v689
    %v691 = vpop.f32.mrb[0].mxu0
    %v692 = vadd.f32 %v468, %v691
    %693 = vmatprep.mubr.bf16.mxu0 0
    %694 = vmatmul.mubr.bf16.gmra.mrb[0].mxu0 %v438
    %v695 = vpop.f32.mrb[0].mxu0
    %v696 = vadd.f32 %v464, %v695
    %v697 = vpop.f32.mrb[0].mxu0
    %v698 = vadd.f32 %v468, %v697
    %v699 = vpop.f32.mrb[0].mxu0
    %v700 = vadd.f32 %v464, %v699
    %v701 = vpop.f32.mrb[0].mxu0
    %v702 = vadd.f32 %v468, %v701
    %703 = vmatprep.mubr.bf16.mxu0 0
    %704 = vmatmul.mubr.bf16.gmra.mrb[0].mxu0 %v439
    %v705 = vpop.f32.mrb[0].mxu0
    %v706 = vadd.f32 %v464, %v705
    %v707 = vpop.f32.mrb[0].mxu0
    %v708 = vadd.f32 %v468, %v707
    %v709 = vpop.f32.mrb[0].mxu0
    %v710 = vadd.f32 %v464, %v709
    %v711 = vpop.f32.mrb[0].mxu0
    %v712 = vadd.f32 %v468, %v711
    %713 = vmatprep.mubr.bf16.mxu0 0
    %714 = vmatmul.mubr.bf16.gmra.mrb[0].mxu0 %v440
    %v715 = vpop.f32.mrb[0].mxu0
    %v716 = vadd.f32 %v464, %v715
    %v717 = vpop.f32.mrb[0].mxu0
    %v718 = vadd.f32 %v468, %v717
    %v719 = vpop.f32.mrb[0].mxu0
    %v720 = vadd.f32 %v464, %v719
    %v721 = vpop.f32.mrb[0].mxu0
    %v722 = vadd.f32 %v468, %v721
    %723 = vmatprep.mubr.bf16.mxu0 0
    %724 = vmatmul.mubr.bf16.gmra.mrb[0].mxu0 %v441
    %v725 = vpop.f32.mrb[0].mxu0
    %v726 = vadd.f32 %v464, %v725
    %v727 = vpop.f32.mrb[0].mxu0
    %v728 = vadd.f32 %v468, %v727
    %v729 = vpop.f32.mrb[0].mxu0
    %v730 = vadd.f32 %v464, %v729
    %v731 = vpop.f32.mrb[0].mxu0
    %v732 = vadd.f32 %v468, %v731
    %733 = vmatprep.mubr.bf16.mxu0 0
    %734 = vmatmul.mubr.bf16.gmra.mrb[0].mxu0 %v442
    %v735 = vpop.f32.mrb[0].mxu0
    %v736 = vadd.f32 %v464, %v735
    %v737 = vpop.f32.mrb[0].mxu0
    %v738 = vadd.f32 %v468, %v737
    %v739 = vpop.f32.mrb[0].mxu0
    %v740 = vadd.f32 %v464, %v739
    %v741 = vpop.f32.mrb[0].mxu0
    %v742 = vadd.f32 %v468, %v741
    %743 = vdwg.mxu0
    %v744 = vmax.f32 %v586, 0.0
    %v745 = vmax.f32 %v588, 0.0
    %v746 = vmax.f32 %v590, 0.0
    %v747 = vmax.f32 %v592, 0.0
    %v748 = vmax.f32 %v596, 0.0
    %v749 = vmax.f32 %v598, 0.0
    %v750 = vmax.f32 %v600, 0.0
    %v751 = vmax.f32 %v602, 0.0
    %v752 = vmax.f32 %v606, 0.0
    %v753 = vmax.f32 %v608, 0.0
    %v754 = vmax.f32 %v610, 0.0
    %v755 = vmax.f32 %v612, 0.0
    %v756 = vmax.f32 %v616, 0.0
    %v757 = vmax.f32 %v618, 0.0
    %v758 = vmax.f32 %v620, 0.0
    %v759 = vmax.f32 %v622, 0.0
    %v760 = vmax.f32 %v626, 0.0
    %v761 = vmax.f32 %v628, 0.0
    %v762 = vmax.f32 %v630, 0.0
    %v763 = vmax.f32 %v632, 0.0
    %v764 = vmax.f32 %v636, 0.0
    %v765 = vmax.f32 %v638, 0.0
    %v766 = vmax.f32 %v640, 0.0
    %v767 = vmax.f32 %v642, 0.0
    %v768 = vmax.f32 %v646, 0.0
    %v769 = vmax.f32 %v648, 0.0
    %v770 = vmax.f32 %v650, 0.0
    %v771 = vmax.f32 %v652, 0.0
    %v772 = vmax.f32 %v656, 0.0
    %v773 = vmax.f32 %v658, 0.0
    %v774 = vmax.f32 %v660, 0.0
    %v775 = vmax.f32 %v662, 0.0
    %v776 = vmax.f32 %v666, 0.0
    %v777 = vmax.f32 %v668, 0.0
    %v778 = vmax.f32 %v670, 0.0
    %v779 = vmax.f32 %v672, 0.0
    %v780 = vmax.f32 %v676, 0.0
    %v781 = vmax.f32 %v678, 0.0
    %v782 = vmax.f32 %v680, 0.0
    %v783 = vmax.f32 %v682, 0.0
    %v784 = vmax.f32 %v686, 0.0
    %v785 = vmax.f32 %v688, 0.0
    %v786 = vmax.f32 %v690, 0.0
    %v787 = vmax.f32 %v692, 0.0
    %v788 = vmax.f32 %v696, 0.0
    %v789 = vmax.f32 %v698, 0.0
    %v790 = vmax.f32 %v700, 0.0
    %v791 = vmax.f32 %v702, 0.0
    %v792 = vmax.f32 %v706, 0.0
    %v793 = vmax.f32 %v708, 0.0
    %v794 = vmax.f32 %v710, 0.0
    %v795 = vmax.f32 %v712, 0.0
    %v796 = vmax.f32 %v716, 0.0
    %v797 = vmax.f32 %v718, 0.0
    %v798 = vmax.f32 %v720, 0.0
    %v799 = vmax.f32 %v722, 0.0
    %v800 = vmax.f32 %v726, 0.0
    %v801 = vmax.f32 %v728, 0.0
    %v802 = vmax.f32 %v730, 0.0
    %v803 = vmax.f32 %v732, 0.0
    %v804 = vmax.f32 %v736, 0.0
    %v805 = vmax.f32 %v738, 0.0
    %v806 = vmax.f32 %v740, 0.0
    %v807 = vmax.f32 %v742, 0.0
    %v808 = vpack.c.bf16 %v746, %v744
    %v809 = vpack.c.bf16 %v747, %v745
    %v810 = vpack.c.bf16 %v750, %v748
    %v811 = vpack.c.bf16 %v751, %v749
    %v812 = vpack.c.bf16 %v754, %v752
    %v813 = vpack.c.bf16 %v755, %v753
    %v814 = vpack.c.bf16 %v758, %v756
    %v815 = vpack.c.bf16 %v759, %v757
    %v816 = vpack.c.bf16 %v762, %v760
    %v817 = vpack.c.bf16 %v763, %v761
    %v818 = vpack.c.bf16 %v766, %v764
    %v819 = vpack.c.bf16 %v767, %v765
    %v820 = vpack.c.bf16 %v770, %v768
    %v821 = vpack.c.bf16 %v771, %v769
    %v822 = vpack.c.bf16 %v774, %v772
    %v823 = vpack.c.bf16 %v775, %v773
    %v824 = vpack.c.bf16 %v778, %v776
    %v825 = vpack.c.bf16 %v779, %v777
    %v826 = vpack.c.bf16 %v782, %v780
    %v827 = vpack.c.bf16 %v783, %v781
    %v828 = vpack.c.bf16 %v786, %v784
    %v829 = vpack.c.bf16 %v787, %v785
    %v830 = vpack.c.bf16 %v790, %v788
    %v831 = vpack.c.bf16 %v791, %v789
    %v832 = vpack.c.bf16 %v794, %v792
    %v833 = vpack.c.bf16 %v795, %v793
    %v834 = vpack.c.bf16 %v798, %v796
    %v835 = vpack.c.bf16 %v799, %v797
    %v836 = vpack.c.bf16 %v802, %v800
    %v837 = vpack.c.bf16 %v803, %v801
    %v838 = vpack.c.bf16 %v806, %v804
    %v839 = vpack.c.bf16 %v807, %v805
    %v840 = vld [vmem:[%s5] sm:$0xff]
    %v841 = vld [vmem:[%s5 + $0x8] sm:$0xff]
    %v842 = vld [vmem:[%s5 + $0x10] sm:$0xff]
    %v843 = vld [vmem:[%s5 + $0x18] sm:$0xff]
    %v844 = vld [vmem:[%s5 + $0x20] sm:$0xff]
    %v845 = vld [vmem:[%s5 + $0x28] sm:$0xff]
    %v846 = vld [vmem:[%s5 + $0x30] sm:$0xff]
    %v847 = vld [vmem:[%s5 + $0x38] sm:$0xff]
    %v848 = vld [vmem:[%s5 + $0x40] sm:$0xff]
    %v849 = vld [vmem:[%s5 + $0x48] sm:$0xff]
    %v850 = vld [vmem:[%s5 + $0x50] sm:$0xff]
    %v851 = vld [vmem:[%s5 + $0x58] sm:$0xff]
    %v852 = vld [vmem:[%s5 + $0x60] sm:$0xff]
    %v853 = vld [vmem:[%s5 + $0x68] sm:$0xff]
    %v854 = vld [vmem:[%s5 + $0x70] sm:$0xff]
    %v855 = vld [vmem:[%s5 + $0x78] sm:$0xff]
    %v856 = vld [vmem:[%s5 + $0x80] sm:$0xff]
    %v857 = vld [vmem:[%s5 + $0x88] sm:$0xff]
    %v858 = vld [vmem:[%s5 + $0x90] sm:$0xff]
    %v859 = vld [vmem:[%s5 + $0x98] sm:$0xff]
    %v860 = vld [vmem:[%s5 + $0xa0] sm:$0xff]
    %v861 = vld [vmem:[%s5 + $0xa8] sm:$0xff]
    %v862 = vld [vmem:[%s5 + $0xb0] sm:$0xff]
    %v863 = vld [vmem:[%s5 + $0xb8] sm:$0xff]
    %v864 = vld [vmem:[%s5 + $0xc0] sm:$0xff]
    %v865 = vld [vmem:[%s5 + $0xc8] sm:$0xff]
    %v866 = vld [vmem:[%s5 + $0xd0] sm:$0xff]
    %v867 = vld [vmem:[%s5 + $0xd8] sm:$0xff]
    %v868 = vld [vmem:[%s5 + $0xe0] sm:$0xff]
    %v869 = vld [vmem:[%s5 + $0xe8] sm:$0xff]
    %v870 = vld [vmem:[%s5 + $0xf0] sm:$0xff]
    %v871 = vld [vmem:[%s5 + $0xf8] sm:$0xff]
    %v872 = vld [vmem:[#allocation8] sm:$0x3]
    %v874 = vlaneseq
    %v875 = vshrl.u32 %v874, 7
    %v876 = vsub.s32 0, %v875
    %v877 = vrot.slane %v872, %v876
    %v878 = vlaneseq
    %v879 = vshrl.u32 %v878, 7
    %v880 = vsub.s32 1, %v879
    %v881 = vrot.slane %v872, %v880
    %v916 = vunpack.c.l.b16 %v840
    %v917 = vunpack.c.h.b16 %v840
    %v918 = vunpack.c.l.b16 %v841
    %v919 = vunpack.c.h.b16 %v841
    %v920 = vunpack.c.l.b16 %v842
    %v921 = vunpack.c.h.b16 %v842
    %v922 = vunpack.c.l.b16 %v843
    %v923 = vunpack.c.h.b16 %v843
    %v924 = vunpack.c.l.b16 %v844
    %v925 = vunpack.c.h.b16 %v844
    %v926 = vunpack.c.l.b16 %v845
    %v927 = vunpack.c.h.b16 %v845
    %v928 = vunpack.c.l.b16 %v846
    %v929 = vunpack.c.h.b16 %v846
    %v930 = vunpack.c.l.b16 %v847
    %v931 = vunpack.c.h.b16 %v847
    %v932 = vunpack.c.l.b16 %v848
    %v933 = vunpack.c.h.b16 %v848
    %v934 = vunpack.c.l.b16 %v849
    %v935 = vunpack.c.h.b16 %v849
    %v936 = vunpack.c.l.b16 %v850
    %v937 = vunpack.c.h.b16 %v850
    %v938 = vunpack.c.l.b16 %v851
    %v939 = vunpack.c.h.b16 %v851
    %v940 = vunpack.c.l.b16 %v852
    %v941 = vunpack.c.h.b16 %v852
    %v942 = vunpack.c.l.b16 %v853
    %v943 = vunpack.c.h.b16 %v853
    %v944 = vunpack.c.l.b16 %v854
    %v945 = vunpack.c.h.b16 %v854
    %v946 = vunpack.c.l.b16 %v855
    %v947 = vunpack.c.h.b16 %v855
    %v948 = vunpack.c.l.b16 %v856
    %v949 = vunpack.c.h.b16 %v856
    %v950 = vunpack.c.l.b16 %v857
    %v951 = vunpack.c.h.b16 %v857
    %v952 = vunpack.c.l.b16 %v858
    %v953 = vunpack.c.h.b16 %v858
    %v954 = vunpack.c.l.b16 %v859
    %v955 = vunpack.c.h.b16 %v859
    %v956 = vunpack.c.l.b16 %v860
    %v957 = vunpack.c.h.b16 %v860
    %v958 = vunpack.c.l.b16 %v861
    %v959 = vunpack.c.h.b16 %v861
    %v960 = vunpack.c.l.b16 %v862
    %v961 = vunpack.c.h.b16 %v862
    %v962 = vunpack.c.l.b16 %v863
    %v963 = vunpack.c.h.b16 %v863
    %v964 = vunpack.c.l.b16 %v864
    %v965 = vunpack.c.h.b16 %v864
    %v966 = vunpack.c.l.b16 %v865
    %v967 = vunpack.c.h.b16 %v865
    %v968 = vunpack.c.l.b16 %v866
    %v969 = vunpack.c.h.b16 %v866
    %v970 = vunpack.c.l.b16 %v867
    %v971 = vunpack.c.h.b16 %v867
    %v972 = vunpack.c.l.b16 %v868
    %v973 = vunpack.c.h.b16 %v868
    %v974 = vunpack.c.l.b16 %v869
    %v975 = vunpack.c.h.b16 %v869
    %v976 = vunpack.c.l.b16 %v870
    %v977 = vunpack.c.h.b16 %v870
    %v978 = vunpack.c.l.b16 %v871
    %v979 = vunpack.c.h.b16 %v871
    %v980 = vpack.c.b16 %v918, %v916
    %v981 = vpack.c.b16 %v919, %v917
    %v982 = vpack.c.b16 %v922, %v920
    %v983 = vpack.c.b16 %v923, %v921
    %v984 = vpack.c.b16 %v926, %v924
    %v985 = vpack.c.b16 %v927, %v925
    %v986 = vpack.c.b16 %v930, %v928
    %v987 = vpack.c.b16 %v931, %v929
    %v988 = vpack.c.b16 %v934, %v932
    %v989 = vpack.c.b16 %v935, %v933
    %v990 = vpack.c.b16 %v938, %v936
    %v991 = vpack.c.b16 %v939, %v937
    %v992 = vpack.c.b16 %v942, %v940
    %v993 = vpack.c.b16 %v943, %v941
    %v994 = vpack.c.b16 %v946, %v944
    %v995 = vpack.c.b16 %v947, %v945
    %v996 = vpack.c.b16 %v950, %v948
    %v997 = vpack.c.b16 %v951, %v949
    %v998 = vpack.c.b16 %v954, %v952
    %v999 = vpack.c.b16 %v955, %v953
    %v1000 = vpack.c.b16 %v958, %v956
    %v1001 = vpack.c.b16 %v959, %v957
    %v1002 = vpack.c.b16 %v962, %v960
    %v1003 = vpack.c.b16 %v963, %v961
    %v1004 = vpack.c.b16 %v966, %v964
    %v1005 = vpack.c.b16 %v967, %v965
    %v1006 = vpack.c.b16 %v970, %v968
    %v1007 = vpack.c.b16 %v971, %v969
    %v1008 = vpack.c.b16 %v974, %v972
    %v1009 = vpack.c.b16 %v975, %v973
    %v1010 = vpack.c.b16 %v978, %v976
    %v1011 = vpack.c.b16 %v979, %v977
    %1044 = vmatprep.subr.bf16.mxu0 %v981
    %1045 = vmatpush1.bf16.msra.mxu0 %v980
    %1046 = vmatprep.subr.bf16.mxu0 %v983
    %1047 = vmatpush1.bf16.msra.mxu0 %v982
    %1048 = vmatprep.subr.bf16.mxu0 %v985
    %1049 = vmatpush1.bf16.msra.mxu0 %v984
    %1050 = vmatprep.subr.bf16.mxu0 %v987
    %1051 = vmatpush1.bf16.msra.mxu0 %v986
    %1052 = vmatprep.subr.bf16.mxu0 %v989
    %1053 = vmatpush1.bf16.msra.mxu0 %v988
    %1054 = vmatprep.subr.bf16.mxu0 %v991
    %1055 = vmatpush1.bf16.msra.mxu0 %v990
    %1056 = vmatprep.subr.bf16.mxu0 %v993
    %1057 = vmatpush1.bf16.msra.mxu0 %v992
    %1058 = vmatprep.subr.bf16.mxu0 %v995
    %1059 = vmatpush1.bf16.msra.mxu0 %v994
    %1060 = vmatprep.subr.bf16.mxu0 %v997
    %1061 = vmatpush1.bf16.msra.mxu0 %v996
    %1062 = vmatprep.subr.bf16.mxu0 %v999
    %1063 = vmatpush1.bf16.msra.mxu0 %v998
    %1064 = vmatprep.subr.bf16.mxu0 %v1001
    %1065 = vmatpush1.bf16.msra.mxu0 %v1000
    %1066 = vmatprep.subr.bf16.mxu0 %v1003
    %1067 = vmatpush1.bf16.msra.mxu0 %v1002
    %1068 = vmatprep.subr.bf16.mxu0 %v1005
    %1069 = vmatpush1.bf16.msra.mxu0 %v1004
    %1070 = vmatprep.subr.bf16.mxu0 %v1007
    %1071 = vmatpush1.bf16.msra.mxu0 %v1006
    %1072 = vmatprep.subr.bf16.mxu0 %v1009
    %1073 = vmatpush1.bf16.msra.mxu0 %v1008
    %1074 = vmatprep.subr.bf16.mxu0 %v1011
    %1075 = vmatpush1.bf16.msra.mxu0 %v1010
    %1076 = vmatprep.mubr.bf16.mxu0 %v809
    %1077 = vmatmul.mubr.bf16.gmra.mrb[0].mxu0 %v808
    %v1078 = vpop.f32.mrb[0].mxu0
    %v1079 = vadd.f32 %v877, %v1078
    %v1080 = vpop.f32.mrb[0].mxu0
    %v1081 = vadd.f32 %v881, %v1080
    %v1082 = vpop.f32.mrb[0].mxu0
    %v1083 = vadd.f32 %v877, %v1082
    %v1084 = vpop.f32.mrb[0].mxu0
    %v1085 = vadd.f32 %v881, %v1084
    %1086 = vmatprep.mubr.bf16.mxu0 %v811
    %1087 = vmatmul.mubr.bf16.gmra.mrb[0].mxu0 %v810
    %v1088 = vpop.f32.mrb[0].mxu0
    %v1089 = vadd.f32 %v877, %v1088
    %v1090 = vpop.f32.mrb[0].mxu0
    %v1091 = vadd.f32 %v881, %v1090
    %v1092 = vpop.f32.mrb[0].mxu0
    %v1093 = vadd.f32 %v877, %v1092
    %v1094 = vpop.f32.mrb[0].mxu0
    %v1095 = vadd.f32 %v881, %v1094
    %1096 = vmatprep.mubr.bf16.mxu0 %v813
    %1097 = vmatmul.mubr.bf16.gmra.mrb[0].mxu0 %v812
    %v1098 = vpop.f32.mrb[0].mxu0
    %v1099 = vadd.f32 %v877, %v1098
    %v1100 = vpop.f32.mrb[0].mxu0
    %v1101 = vadd.f32 %v881, %v1100
    %v1102 = vpop.f32.mrb[0].mxu0
    %v1103 = vadd.f32 %v877, %v1102
    %v1104 = vpop.f32.mrb[0].mxu0
    %v1105 = vadd.f32 %v881, %v1104
    %1106 = vmatprep.mubr.bf16.mxu0 %v815
    %1107 = vmatmul.mubr.bf16.gmra.mrb[0].mxu0 %v814
    %v1108 = vpop.f32.mrb[0].mxu0
    %v1109 = vadd.f32 %v877, %v1108
    %v1110 = vpop.f32.mrb[0].mxu0
    %v1111 = vadd.f32 %v881, %v1110
    %v1112 = vpop.f32.mrb[0].mxu0
    %v1113 = vadd.f32 %v877, %v1112
    %v1114 = vpop.f32.mrb[0].mxu0
    %v1115 = vadd.f32 %v881, %v1114
    %1116 = vmatprep.mubr.bf16.mxu0 %v817
    %1117 = vmatmul.mubr.bf16.gmra.mrb[0].mxu0 %v816
    %v1118 = vpop.f32.mrb[0].mxu0
    %v1119 = vadd.f32 %v877, %v1118
    %v1120 = vpop.f32.mrb[0].mxu0
    %v1121 = vadd.f32 %v881, %v1120
    %v1122 = vpop.f32.mrb[0].mxu0
    %v1123 = vadd.f32 %v877, %v1122
    %v1124 = vpop.f32.mrb[0].mxu0
    %v1125 = vadd.f32 %v881, %v1124
    %1126 = vmatprep.mubr.bf16.mxu0 %v819
    %1127 = vmatmul.mubr.bf16.gmra.mrb[0].mxu0 %v818
    %v1128 = vpop.f32.mrb[0].mxu0
    %v1129 = vadd.f32 %v877, %v1128
    %v1130 = vpop.f32.mrb[0].mxu0
    %v1131 = vadd.f32 %v881, %v1130
    %v1132 = vpop.f32.mrb[0].mxu0
    %v1133 = vadd.f32 %v877, %v1132
    %v1134 = vpop.f32.mrb[0].mxu0
    %v1135 = vadd.f32 %v881, %v1134
    %1136 = vmatprep.mubr.bf16.mxu0 %v821
    %1137 = vmatmul.mubr.bf16.gmra.mrb[0].mxu0 %v820
    %v1138 = vpop.f32.mrb[0].mxu0
    %v1139 = vadd.f32 %v877, %v1138
    %v1140 = vpop.f32.mrb[0].mxu0
    %v1141 = vadd.f32 %v881, %v1140
    %v1142 = vpop.f32.mrb[0].mxu0
    %v1143 = vadd.f32 %v877, %v1142
    %v1144 = vpop.f32.mrb[0].mxu0
    %v1145 = vadd.f32 %v881, %v1144
    %1146 = vmatprep.mubr.bf16.mxu0 %v823
    %1147 = vmatmul.mubr.bf16.gmra.mrb[0].mxu0 %v822
    %v1148 = vpop.f32.mrb[0].mxu0
    %v1149 = vadd.f32 %v877, %v1148
    %v1150 = vpop.f32.mrb[0].mxu0
    %v1151 = vadd.f32 %v881, %v1150
    %v1152 = vpop.f32.mrb[0].mxu0
    %v1153 = vadd.f32 %v877, %v1152
    %v1154 = vpop.f32.mrb[0].mxu0
    %v1155 = vadd.f32 %v881, %v1154
    %1156 = vmatprep.mubr.bf16.mxu0 %v825
    %1157 = vmatmul.mubr.bf16.gmra.mrb[0].mxu0 %v824
    %v1158 = vpop.f32.mrb[0].mxu0
    %v1159 = vadd.f32 %v877, %v1158
    %v1160 = vpop.f32.mrb[0].mxu0
    %v1161 = vadd.f32 %v881, %v1160
    %v1162 = vpop.f32.mrb[0].mxu0
    %v1163 = vadd.f32 %v877, %v1162
    %v1164 = vpop.f32.mrb[0].mxu0
    %v1165 = vadd.f32 %v881, %v1164
    %1166 = vmatprep.mubr.bf16.mxu0 %v827
    %1167 = vmatmul.mubr.bf16.gmra.mrb[0].mxu0 %v826
    %v1168 = vpop.f32.mrb[0].mxu0
    %v1169 = vadd.f32 %v877, %v1168
    %v1170 = vpop.f32.mrb[0].mxu0
    %v1171 = vadd.f32 %v881, %v1170
    %v1172 = vpop.f32.mrb[0].mxu0
    %v1173 = vadd.f32 %v877, %v1172
    %v1174 = vpop.f32.mrb[0].mxu0
    %v1175 = vadd.f32 %v881, %v1174
    %1176 = vmatprep.mubr.bf16.mxu0 %v829
    %1177 = vmatmul.mubr.bf16.gmra.mrb[0].mxu0 %v828
    %v1178 = vpop.f32.mrb[0].mxu0
    %v1179 = vadd.f32 %v877, %v1178
    %v1180 = vpop.f32.mrb[0].mxu0
    %v1181 = vadd.f32 %v881, %v1180
    %v1182 = vpop.f32.mrb[0].mxu0
    %v1183 = vadd.f32 %v877, %v1182
    %v1184 = vpop.f32.mrb[0].mxu0
    %v1185 = vadd.f32 %v881, %v1184
    %1186 = vmatprep.mubr.bf16.mxu0 %v831
    %1187 = vmatmul.mubr.bf16.gmra.mrb[0].mxu0 %v830
    %v1188 = vpop.f32.mrb[0].mxu0
    %v1189 = vadd.f32 %v877, %v1188
    %v1190 = vpop.f32.mrb[0].mxu0
    %v1191 = vadd.f32 %v881, %v1190
    %v1192 = vpop.f32.mrb[0].mxu0
    %v1193 = vadd.f32 %v877, %v1192
    %v1194 = vpop.f32.mrb[0].mxu0
    %v1195 = vadd.f32 %v881, %v1194
    %1196 = vmatprep.mubr.bf16.mxu0 %v833
    %1197 = vmatmul.mubr.bf16.gmra.mrb[0].mxu0 %v832
    %v1198 = vpop.f32.mrb[0].mxu0
    %v1199 = vadd.f32 %v877, %v1198
    %v1200 = vpop.f32.mrb[0].mxu0
    %v1201 = vadd.f32 %v881, %v1200
    %v1202 = vpop.f32.mrb[0].mxu0
    %v1203 = vadd.f32 %v877, %v1202
    %v1204 = vpop.f32.mrb[0].mxu0
    %v1205 = vadd.f32 %v881, %v1204
    %1206 = vmatprep.mubr.bf16.mxu0 %v835
    %1207 = vmatmul.mubr.bf16.gmra.mrb[0].mxu0 %v834
    %v1208 = vpop.f32.mrb[0].mxu0
    %v1209 = vadd.f32 %v877, %v1208
    %v1210 = vpop.f32.mrb[0].mxu0
    %v1211 = vadd.f32 %v881, %v1210
    %v1212 = vpop.f32.mrb[0].mxu0
    %v1213 = vadd.f32 %v877, %v1212
    %v1214 = vpop.f32.mrb[0].mxu0
    %v1215 = vadd.f32 %v881, %v1214
    %1216 = vmatprep.mubr.bf16.mxu0 %v837
    %1217 = vmatmul.mubr.bf16.gmra.mrb[0].mxu0 %v836
    %v1218 = vpop.f32.mrb[0].mxu0
    %v1219 = vadd.f32 %v877, %v1218
    %v1220 = vpop.f32.mrb[0].mxu0
    %v1221 = vadd.f32 %v881, %v1220
    %v1222 = vpop.f32.mrb[0].mxu0
    %v1223 = vadd.f32 %v877, %v1222
    %v1224 = vpop.f32.mrb[0].mxu0
    %v1225 = vadd.f32 %v881, %v1224
    %1226 = vmatprep.mubr.bf16.mxu0 %v839
    %1227 = vmatmul.mubr.bf16.gmra.mrb[0].mxu0 %v838
    %v1228 = vpop.f32.mrb[0].mxu0
    %v1229 = vadd.f32 %v877, %v1228
    %v1230 = vpop.f32.mrb[0].mxu0
    %v1231 = vadd.f32 %v881, %v1230
    %v1232 = vpop.f32.mrb[0].mxu0
    %v1233 = vadd.f32 %v877, %v1232
    %v1234 = vpop.f32.mrb[0].mxu0
    %v1235 = vadd.f32 %v881, %v1234
    %1236 = vdwg.mxu0
    %v1237 = vmax.f32 %v1079, 0.0
    %v1238 = vmax.f32 %v1081, 0.0
    %v1239 = vmax.f32 %v1083, 0.0
    %v1240 = vmax.f32 %v1085, 0.0
    %v1241 = vmax.f32 %v1089, 0.0
    %v1242 = vmax.f32 %v1091, 0.0
    %v1243 = vmax.f32 %v1093, 0.0
    %v1244 = vmax.f32 %v1095, 0.0
    %v1245 = vmax.f32 %v1099, 0.0
    %v1246 = vmax.f32 %v1101, 0.0
    %v1247 = vmax.f32 %v1103, 0.0
    %v1248 = vmax.f32 %v1105, 0.0
    %v1249 = vmax.f32 %v1109, 0.0
    %v1250 = vmax.f32 %v1111, 0.0
    %v1251 = vmax.f32 %v1113, 0.0
    %v1252 = vmax.f32 %v1115, 0.0
    %v1253 = vmax.f32 %v1119, 0.0
    %v1254 = vmax.f32 %v1121, 0.0
    %v1255 = vmax.f32 %v1123, 0.0
    %v1256 = vmax.f32 %v1125, 0.0
    %v1257 = vmax.f32 %v1129, 0.0
    %v1258 = vmax.f32 %v1131, 0.0
    %v1259 = vmax.f32 %v1133, 0.0
    %v1260 = vmax.f32 %v1135, 0.0
    %v1261 = vmax.f32 %v1139, 0.0
    %v1262 = vmax.f32 %v1141, 0.0
    %v1263 = vmax.f32 %v1143, 0.0
    %v1264 = vmax.f32 %v1145, 0.0
    %v1265 = vmax.f32 %v1149, 0.0
    %v1266 = vmax.f32 %v1151, 0.0
    %v1267 = vmax.f32 %v1153, 0.0
    %v1268 = vmax.f32 %v1155, 0.0
    %v1269 = vmax.f32 %v1159, 0.0
    %v1270 = vmax.f32 %v1161, 0.0
    %v1271 = vmax.f32 %v1163, 0.0
    %v1272 = vmax.f32 %v1165, 0.0
    %v1273 = vmax.f32 %v1169, 0.0
    %v1274 = vmax.f32 %v1171, 0.0
    %v1275 = vmax.f32 %v1173, 0.0
    %v1276 = vmax.f32 %v1175, 0.0
    %v1277 = vmax.f32 %v1179, 0.0
    %v1278 = vmax.f32 %v1181, 0.0
    %v1279 = vmax.f32 %v1183, 0.0
    %v1280 = vmax.f32 %v1185, 0.0
    %v1281 = vmax.f32 %v1189, 0.0
    %v1282 = vmax.f32 %v1191, 0.0
    %v1283 = vmax.f32 %v1193, 0.0
    %v1284 = vmax.f32 %v1195, 0.0
    %v1285 = vmax.f32 %v1199, 0.0
    %v1286 = vmax.f32 %v1201, 0.0
    %v1287 = vmax.f32 %v1203, 0.0
    %v1288 = vmax.f32 %v1205, 0.0
    %v1289 = vmax.f32 %v1209, 0.0
    %v1290 = vmax.f32 %v1211, 0.0
    %v1291 = vmax.f32 %v1213, 0.0
    %v1292 = vmax.f32 %v1215, 0.0
    %v1293 = vmax.f32 %v1219, 0.0
    %v1294 = vmax.f32 %v1221, 0.0
    %v1295 = vmax.f32 %v1223, 0.0
    %v1296 = vmax.f32 %v1225, 0.0
    %v1297 = vmax.f32 %v1229, 0.0
    %v1298 = vmax.f32 %v1231, 0.0
    %v1299 = vmax.f32 %v1233, 0.0
    %v1300 = vmax.f32 %v1235, 0.0
    %v1301 = vpack.c.bf16 %v1239, %v1237
    %v1302 = vpack.c.bf16 %v1240, %v1238
    %v1303 = vpack.c.bf16 %v1243, %v1241
    %v1304 = vpack.c.bf16 %v1244, %v1242
    %v1305 = vpack.c.bf16 %v1247, %v1245
    %v1306 = vpack.c.bf16 %v1248, %v1246
    %v1307 = vpack.c.bf16 %v1251, %v1249
    %v1308 = vpack.c.bf16 %v1252, %v1250
    %v1309 = vpack.c.bf16 %v1255, %v1253
    %v1310 = vpack.c.bf16 %v1256, %v1254
    %v1311 = vpack.c.bf16 %v1259, %v1257
    %v1312 = vpack.c.bf16 %v1260, %v1258
    %v1313 = vpack.c.bf16 %v1263, %v1261
    %v1314 = vpack.c.bf16 %v1264, %v1262
    %v1315 = vpack.c.bf16 %v1267, %v1265
    %v1316 = vpack.c.bf16 %v1268, %v1266
    %v1317 = vpack.c.bf16 %v1271, %v1269
    %v1318 = vpack.c.bf16 %v1272, %v1270
    %v1319 = vpack.c.bf16 %v1275, %v1273
    %v1320 = vpack.c.bf16 %v1276, %v1274
    %v1321 = vpack.c.bf16 %v1279, %v1277
    %v1322 = vpack.c.bf16 %v1280, %v1278
    %v1323 = vpack.c.bf16 %v1283, %v1281
    %v1324 = vpack.c.bf16 %v1284, %v1282
    %v1325 = vpack.c.bf16 %v1287, %v1285
    %v1326 = vpack.c.bf16 %v1288, %v1286
    %v1327 = vpack.c.bf16 %v1291, %v1289
    %v1328 = vpack.c.bf16 %v1292, %v1290
    %v1329 = vpack.c.bf16 %v1295, %v1293
    %v1330 = vpack.c.bf16 %v1296, %v1294
    %v1331 = vpack.c.bf16 %v1299, %v1297
    %v1332 = vpack.c.bf16 %v1300, %v1298
    %v1333 = vld [vmem:[#allocation10] sm:$0xf]
    %v1334 = vld [vmem:[#allocation10 + $0x4] sm:$0xf]
    %v1335 = vld [vmem:[#allocation10 + $0x8] sm:$0xf]
    %v1336 = vld [vmem:[#allocation10 + $0xc] sm:$0xf]
    %v1337 = vld [vmem:[#allocation10 + $0x10] sm:$0xf]
    %v1338 = vld [vmem:[#allocation10 + $0x14] sm:$0xf]
    %v1339 = vld [vmem:[#allocation10 + $0x18] sm:$0xf]
    %v1340 = vld [vmem:[#allocation10 + $0x1c] sm:$0xf]
    %v1341 = vld [vmem:[#allocation10 + $0x20] sm:$0xf]
    %v1342 = vld [vmem:[#allocation10 + $0x24] sm:$0xf]
    %v1343 = vld [vmem:[#allocation10 + $0x28] sm:$0xf]
    %v1344 = vld [vmem:[#allocation10 + $0x2c] sm:$0xf]
    %v1345 = vld [vmem:[#allocation10 + $0x30] sm:$0xf]
    %v1346 = vld [vmem:[#allocation10 + $0x34] sm:$0xf]
    %v1347 = vld [vmem:[#allocation10 + $0x38] sm:$0xf]
    %v1348 = vld [vmem:[#allocation10 + $0x3c] sm:$0xf]
    %v1349 = vld [vmem:[#allocation10 + $0x40] sm:$0xf]
    %v1350 = vld [vmem:[#allocation10 + $0x44] sm:$0xf]
    %v1351 = vld [vmem:[#allocation10 + $0x48] sm:$0xf]
    %v1352 = vld [vmem:[#allocation10 + $0x4c] sm:$0xf]
    %v1353 = vld [vmem:[#allocation10 + $0x50] sm:$0xf]
    %v1354 = vld [vmem:[#allocation10 + $0x54] sm:$0xf]
    %v1355 = vld [vmem:[#allocation10 + $0x58] sm:$0xf]
    %v1356 = vld [vmem:[#allocation10 + $0x5c] sm:$0xf]
    %v1357 = vld [vmem:[#allocation10 + $0x60] sm:$0xf]
    %v1358 = vld [vmem:[#allocation10 + $0x64] sm:$0xf]
    %v1359 = vld [vmem:[#allocation10 + $0x68] sm:$0xf]
    %v1360 = vld [vmem:[#allocation10 + $0x6c] sm:$0xf]
    %v1361 = vld [vmem:[#allocation10 + $0x70] sm:$0xf]
    %v1362 = vld [vmem:[#allocation10 + $0x74] sm:$0xf]
    %v1363 = vld [vmem:[#allocation10 + $0x78] sm:$0xf]
    %v1364 = vld [vmem:[#allocation10 + $0x7c] sm:$0xf]
    %v1365 = vld [vmem:[#allocation11] sm:$0x1]
    %v1367 = vlaneseq
    %v1368 = vshrl.u32 %v1367, 7
    %v1369 = vsub.s32 0, %v1368
    %v1370 = vrot.slane %v1365, %v1369
    %v1404 = vunpack.c.l.b16 %v1333
    %v1405 = vunpack.c.l.b16 %v1334
    %v1406 = vunpack.c.l.b16 %v1335
    %v1407 = vunpack.c.l.b16 %v1336
    %v1408 = vunpack.c.l.b16 %v1337
    %v1409 = vunpack.c.l.b16 %v1338
    %v1410 = vunpack.c.l.b16 %v1339
    %v1411 = vunpack.c.l.b16 %v1340
    %v1412 = vunpack.c.l.b16 %v1341
    %v1413 = vunpack.c.l.b16 %v1342
    %v1414 = vunpack.c.l.b16 %v1343
    %v1415 = vunpack.c.l.b16 %v1344
    %v1416 = vunpack.c.l.b16 %v1345
    %v1417 = vunpack.c.l.b16 %v1346
    %v1418 = vunpack.c.l.b16 %v1347
    %v1419 = vunpack.c.l.b16 %v1348
    %v1420 = vunpack.c.l.b16 %v1349
    %v1421 = vunpack.c.l.b16 %v1350
    %v1422 = vunpack.c.l.b16 %v1351
    %v1423 = vunpack.c.l.b16 %v1352
    %v1424 = vunpack.c.l.b16 %v1353
    %v1425 = vunpack.c.l.b16 %v1354
    %v1426 = vunpack.c.l.b16 %v1355
    %v1427 = vunpack.c.l.b16 %v1356
    %v1428 = vunpack.c.l.b16 %v1357
    %v1429 = vunpack.c.l.b16 %v1358
    %v1430 = vunpack.c.l.b16 %v1359
    %v1431 = vunpack.c.l.b16 %v1360
    %v1432 = vunpack.c.l.b16 %v1361
    %v1433 = vunpack.c.l.b16 %v1362
    %v1434 = vunpack.c.l.b16 %v1363
    %v1435 = vunpack.c.l.b16 %v1364
    %v1436 = vpack.c.b16 %v1405, %v1404
    %v1437 = vpack.c.b16 %v1407, %v1406
    %v1438 = vpack.c.b16 %v1409, %v1408
    %v1439 = vpack.c.b16 %v1411, %v1410
    %v1440 = vpack.c.b16 %v1413, %v1412
    %v1441 = vpack.c.b16 %v1415, %v1414
    %v1442 = vpack.c.b16 %v1417, %v1416
    %v1443 = vpack.c.b16 %v1419, %v1418
    %v1444 = vpack.c.b16 %v1421, %v1420
    %v1445 = vpack.c.b16 %v1423, %v1422
    %v1446 = vpack.c.b16 %v1425, %v1424
    %v1447 = vpack.c.b16 %v1427, %v1426
    %v1448 = vpack.c.b16 %v1429, %v1428
    %v1449 = vpack.c.b16 %v1431, %v1430
    %v1450 = vpack.c.b16 %v1433, %v1432
    %v1451 = vpack.c.b16 %v1435, %v1434
    %1468 = vmatprep.subr.bf16.mxu0 0
    %1469 = vmatpush1.bf16.msra.mxu0 %v1436
    %1470 = vmatprep.subr.bf16.mxu0 0
    %1471 = vmatpush1.bf16.msra.mxu0 %v1437
    %1472 = vmatprep.subr.bf16.mxu0 0
    %1473 = vmatpush1.bf16.msra.mxu0 %v1438
    %1474 = vmatprep.subr.bf16.mxu0 0
    %1475 = vmatpush1.bf16.msra.mxu0 %v1439
    %1476 = vmatprep.subr.bf16.mxu0 0
    %1477 = vmatpush1.bf16.msra.mxu0 %v1440
    %1478 = vmatprep.subr.bf16.mxu0 0
    %1479 = vmatpush1.bf16.msra.mxu0 %v1441
    %1480 = vmatprep.subr.bf16.mxu0 0
    %1481 = vmatpush1.bf16.msra.mxu0 %v1442
    %1482 = vmatprep.subr.bf16.mxu0 0
    %1483 = vmatpush1.bf16.msra.mxu0 %v1443
    %1484 = vmatprep.subr.bf16.mxu0 0
    %1485 = vmatpush1.bf16.msra.mxu0 %v1444
    %1486 = vmatprep.subr.bf16.mxu0 0
    %1487 = vmatpush1.bf16.msra.mxu0 %v1445
    %1488 = vmatprep.subr.bf16.mxu0 0
    %1489 = vmatpush1.bf16.msra.mxu0 %v1446
    %1490 = vmatprep.subr.bf16.mxu0 0
    %1491 = vmatpush1.bf16.msra.mxu0 %v1447
    %1492 = vmatprep.subr.bf16.mxu0 0
    %1493 = vmatpush1.bf16.msra.mxu0 %v1448
    %1494 = vmatprep.subr.bf16.mxu0 0
    %1495 = vmatpush1.bf16.msra.mxu0 %v1449
    %1496 = vmatprep.subr.bf16.mxu0 0
    %1497 = vmatpush1.bf16.msra.mxu0 %v1450
    %1498 = vmatprep.subr.bf16.mxu0 0
    %1499 = vmatpush1.bf16.msra.mxu0 %v1451
    %1500 = vmatprep.mubr.bf16.mxu0 %v1302
    %1501 = vmatmul.mubr.bf16.gmra.mrb[0].mxu0 %v1301
    %v1502 = vpop.f32.mrb[0].mxu0
    %v1503 = vadd.f32 %v1370, %v1502
    %v1504 = vpop.f32.mrb[0].mxu0
    %v1505 = vpop.f32.mrb[0].mxu0
    %v1506 = vadd.f32 %v1370, %v1505
    %v1507 = vpop.f32.mrb[0].mxu0
    %1508 = vmatprep.mubr.bf16.mxu0 %v1304
    %1509 = vmatmul.mubr.bf16.gmra.mrb[0].mxu0 %v1303
    %v1510 = vpop.f32.mrb[0].mxu0
    %v1511 = vadd.f32 %v1370, %v1510
    %v1512 = vpop.f32.mrb[0].mxu0
    %v1513 = vpop.f32.mrb[0].mxu0
    %v1514 = vadd.f32 %v1370, %v1513
    %v1515 = vpop.f32.mrb[0].mxu0
    %1516 = vmatprep.mubr.bf16.mxu0 %v1306
    %1517 = vmatmul.mubr.bf16.gmra.mrb[0].mxu0 %v1305
    %v1518 = vpop.f32.mrb[0].mxu0
    %v1519 = vadd.f32 %v1370, %v1518
    %v1520 = vpop.f32.mrb[0].mxu0
    %v1521 = vpop.f32.mrb[0].mxu0
    %v1522 = vadd.f32 %v1370, %v1521
    %v1523 = vpop.f32.mrb[0].mxu0
    %1524 = vmatprep.mubr.bf16.mxu0 %v1308
    %1525 = vmatmul.mubr.bf16.gmra.mrb[0].mxu0 %v1307
    %v1526 = vpop.f32.mrb[0].mxu0
    %v1527 = vadd.f32 %v1370, %v1526
    %v1528 = vpop.f32.mrb[0].mxu0
    %v1529 = vpop.f32.mrb[0].mxu0
    %v1530 = vadd.f32 %v1370, %v1529
    %v1531 = vpop.f32.mrb[0].mxu0
    %1532 = vmatprep.mubr.bf16.mxu0 %v1310
    %1533 = vmatmul.mubr.bf16.gmra.mrb[0].mxu0 %v1309
    %v1534 = vpop.f32.mrb[0].mxu0
    %v1535 = vadd.f32 %v1370, %v1534
    %v1536 = vpop.f32.mrb[0].mxu0
    %v1537 = vpop.f32.mrb[0].mxu0
    %v1538 = vadd.f32 %v1370, %v1537
    %v1539 = vpop.f32.mrb[0].mxu0
    %1540 = vmatprep.mubr.bf16.mxu0 %v1312
    %1541 = vmatmul.mubr.bf16.gmra.mrb[0].mxu0 %v1311
    %v1542 = vpop.f32.mrb[0].mxu0
    %v1543 = vadd.f32 %v1370, %v1542
    %v1544 = vpop.f32.mrb[0].mxu0
    %v1545 = vpop.f32.mrb[0].mxu0
    %v1546 = vadd.f32 %v1370, %v1545
    %v1547 = vpop.f32.mrb[0].mxu0
    %1548 = vmatprep.mubr.bf16.mxu0 %v1314
    %1549 = vmatmul.mubr.bf16.gmra.mrb[0].mxu0 %v1313
    %v1550 = vpop.f32.mrb[0].mxu0
    %v1551 = vadd.f32 %v1370, %v1550
    %v1552 = vpop.f32.mrb[0].mxu0
    %v1553 = vpop.f32.mrb[0].mxu0
    %v1554 = vadd.f32 %v1370, %v1553
    %v1555 = vpop.f32.mrb[0].mxu0
    %1556 = vmatprep.mubr.bf16.mxu0 %v1316
    %1557 = vmatmul.mubr.bf16.gmra.mrb[0].mxu0 %v1315
    %v1558 = vpop.f32.mrb[0].mxu0
    %v1559 = vadd.f32 %v1370, %v1558
    %v1560 = vpop.f32.mrb[0].mxu0
    %v1561 = vpop.f32.mrb[0].mxu0
    %v1562 = vadd.f32 %v1370, %v1561
    %v1563 = vpop.f32.mrb[0].mxu0
    %1564 = vmatprep.mubr.bf16.mxu0 %v1318
    %1565 = vmatmul.mubr.bf16.gmra.mrb[0].mxu0 %v1317
    %v1566 = vpop.f32.mrb[0].mxu0
    %v1567 = vadd.f32 %v1370, %v1566
    %v1568 = vpop.f32.mrb[0].mxu0
    %v1569 = vpop.f32.mrb[0].mxu0
    %v1570 = vadd.f32 %v1370, %v1569
    %v1571 = vpop.f32.mrb[0].mxu0
    %1572 = vmatprep.mubr.bf16.mxu0 %v1320
    %1573 = vmatmul.mubr.bf16.gmra.mrb[0].mxu0 %v1319
    %v1574 = vpop.f32.mrb[0].mxu0
    %v1575 = vadd.f32 %v1370, %v1574
    %v1576 = vpop.f32.mrb[0].mxu0
    %v1577 = vpop.f32.mrb[0].mxu0
    %v1578 = vadd.f32 %v1370, %v1577
    %v1579 = vpop.f32.mrb[0].mxu0
    %1580 = vmatprep.mubr.bf16.mxu0 %v1322
    %1581 = vmatmul.mubr.bf16.gmra.mrb[0].mxu0 %v1321
    %v1582 = vpop.f32.mrb[0].mxu0
    %v1583 = vadd.f32 %v1370, %v1582
    %v1584 = vpop.f32.mrb[0].mxu0
    %v1585 = vpop.f32.mrb[0].mxu0
    %v1586 = vadd.f32 %v1370, %v1585
    %v1587 = vpop.f32.mrb[0].mxu0
    %1588 = vmatprep.mubr.bf16.mxu0 %v1324
    %1589 = vmatmul.mubr.bf16.gmra.mrb[0].mxu0 %v1323
    %v1590 = vpop.f32.mrb[0].mxu0
    %v1591 = vadd.f32 %v1370, %v1590
    %v1592 = vpop.f32.mrb[0].mxu0
    %v1593 = vpop.f32.mrb[0].mxu0
    %v1594 = vadd.f32 %v1370, %v1593
    %v1595 = vpop.f32.mrb[0].mxu0
    %1596 = vmatprep.mubr.bf16.mxu0 %v1326
    %1597 = vmatmul.mubr.bf16.gmra.mrb[0].mxu0 %v1325
    %v1598 = vpop.f32.mrb[0].mxu0
    %v1599 = vadd.f32 %v1370, %v1598
    %v1600 = vpop.f32.mrb[0].mxu0
    %v1601 = vpop.f32.mrb[0].mxu0
    %v1602 = vadd.f32 %v1370, %v1601
    %v1603 = vpop.f32.mrb[0].mxu0
    %1604 = vmatprep.mubr.bf16.mxu0 %v1328
    %1605 = vmatmul.mubr.bf16.gmra.mrb[0].mxu0 %v1327
    %v1606 = vpop.f32.mrb[0].mxu0
    %v1607 = vadd.f32 %v1370, %v1606
    %v1608 = vpop.f32.mrb[0].mxu0
    %v1609 = vpop.f32.mrb[0].mxu0
    %v1610 = vadd.f32 %v1370, %v1609
    %v1611 = vpop.f32.mrb[0].mxu0
    %1612 = vmatprep.mubr.bf16.mxu0 %v1330
    %1613 = vmatmul.mubr.bf16.gmra.mrb[0].mxu0 %v1329
    %v1614 = vpop.f32.mrb[0].mxu0
    %v1615 = vadd.f32 %v1370, %v1614
    %v1616 = vpop.f32.mrb[0].mxu0
    %v1617 = vpop.f32.mrb[0].mxu0
    %v1618 = vadd.f32 %v1370, %v1617
    %v1619 = vpop.f32.mrb[0].mxu0
    %1620 = vmatprep.mubr.bf16.mxu0 %v1332
    %1621 = vmatmul.mubr.bf16.gmra.mrb[0].mxu0 %v1331
    %v1622 = vpop.f32.mrb[0].mxu0
    %v1623 = vadd.f32 %v1370, %v1622
    %v1624 = vpop.f32.mrb[0].mxu0
    %v1625 = vpop.f32.mrb[0].mxu0
    %v1626 = vadd.f32 %v1370, %v1625
    %v1627 = vpop.f32.mrb[0].mxu0
    %1628 = vdwg.mxu0
    %v1629 = vmax.f32 %v1503, 0.0
    %v1630 = vmax.f32 %v1506, 0.0
    %v1631 = vmax.f32 %v1511, 0.0
    %v1632 = vmax.f32 %v1514, 0.0
    %v1633 = vmax.f32 %v1519, 0.0
    %v1634 = vmax.f32 %v1522, 0.0
    %v1635 = vmax.f32 %v1527, 0.0
    %v1636 = vmax.f32 %v1530, 0.0
    %v1637 = vmax.f32 %v1535, 0.0
    %v1638 = vmax.f32 %v1538, 0.0
    %v1639 = vmax.f32 %v1543, 0.0
    %v1640 = vmax.f32 %v1546, 0.0
    %v1641 = vmax.f32 %v1551, 0.0
    %v1642 = vmax.f32 %v1554, 0.0
    %v1643 = vmax.f32 %v1559, 0.0
    %v1644 = vmax.f32 %v1562, 0.0
    %v1645 = vmax.f32 %v1567, 0.0
    %v1646 = vmax.f32 %v1570, 0.0
    %v1647 = vmax.f32 %v1575, 0.0
    %v1648 = vmax.f32 %v1578, 0.0
    %v1649 = vmax.f32 %v1583, 0.0
    %v1650 = vmax.f32 %v1586, 0.0
    %v1651 = vmax.f32 %v1591, 0.0
    %v1652 = vmax.f32 %v1594, 0.0
    %v1653 = vmax.f32 %v1599, 0.0
    %v1654 = vmax.f32 %v1602, 0.0
    %v1655 = vmax.f32 %v1607, 0.0
    %v1656 = vmax.f32 %v1610, 0.0
    %v1657 = vmax.f32 %v1615, 0.0
    %v1658 = vmax.f32 %v1618, 0.0
    %v1659 = vmax.f32 %v1623, 0.0
    %v1660 = vmax.f32 %v1626, 0.0
    %v1661 = vpack.c.bf16 %v1630, %v1629
    %v1662 = vpack.c.bf16 %v1632, %v1631
    %v1663 = vpack.c.bf16 %v1634, %v1633
    %v1664 = vpack.c.bf16 %v1636, %v1635
    %v1665 = vpack.c.bf16 %v1638, %v1637
    %v1666 = vpack.c.bf16 %v1640, %v1639
    %v1667 = vpack.c.bf16 %v1642, %v1641
    %v1668 = vpack.c.bf16 %v1644, %v1643
    %v1669 = vpack.c.bf16 %v1646, %v1645
    %v1670 = vpack.c.bf16 %v1648, %v1647
    %v1671 = vpack.c.bf16 %v1650, %v1649
    %v1672 = vpack.c.bf16 %v1652, %v1651
    %v1673 = vpack.c.bf16 %v1654, %v1653
    %v1674 = vpack.c.bf16 %v1656, %v1655
    %v1675 = vpack.c.bf16 %v1658, %v1657
    %v1676 = vpack.c.bf16 %v1660, %v1659
    %v1677 = vld [vmem:[%s9] sm:$0xf]
    %v1678 = vld [vmem:[%s9 + $0x4] sm:$0xf]
    %v1679 = vld [vmem:[%s9 + $0x8] sm:$0xf]
    %v1680 = vld [vmem:[%s9 + $0xc] sm:$0xf]
    %v1681 = vld [vmem:[%s9 + $0x10] sm:$0xf]
    %v1682 = vld [vmem:[%s9 + $0x14] sm:$0xf]
    %v1683 = vld [vmem:[%s9 + $0x18] sm:$0xf]
    %v1684 = vld [vmem:[%s9 + $0x1c] sm:$0xf]
    %v1685 = vld [vmem:[%s9 + $0x20] sm:$0xf]
    %v1686 = vld [vmem:[%s9 + $0x24] sm:$0xf]
    %v1687 = vld [vmem:[%s9 + $0x28] sm:$0xf]
    %v1688 = vld [vmem:[%s9 + $0x2c] sm:$0xf]
    %v1689 = vld [vmem:[%s9 + $0x30] sm:$0xf]
    %v1690 = vld [vmem:[%s9 + $0x34] sm:$0xf]
    %v1691 = vld [vmem:[%s9 + $0x38] sm:$0xf]
    %v1692 = vld [vmem:[%s9 + $0x3c] sm:$0xf]
    %v1693 = vld [vmem:[%s10] sm:$0x1]
    %v1695 = vlaneseq
    %v1696 = vshrl.u32 %v1695, 7
    %v1697 = vsub.s32 0, %v1696
    %v1698 = vrot.slane %v1693, %v1697
    %v1716 = vunpack.c.l.b16 %v1677
    %v1717 = vunpack.c.l.b16 %v1678
    %v1718 = vunpack.c.l.b16 %v1679
    %v1719 = vunpack.c.l.b16 %v1680
    %v1720 = vunpack.c.l.b16 %v1681
    %v1721 = vunpack.c.l.b16 %v1682
    %v1722 = vunpack.c.l.b16 %v1683
    %v1723 = vunpack.c.l.b16 %v1684
    %v1724 = vunpack.c.l.b16 %v1685
    %v1725 = vunpack.c.l.b16 %v1686
    %v1726 = vunpack.c.l.b16 %v1687
    %v1727 = vunpack.c.l.b16 %v1688
    %v1728 = vunpack.c.l.b16 %v1689
    %v1729 = vunpack.c.l.b16 %v1690
    %v1730 = vunpack.c.l.b16 %v1691
    %v1731 = vunpack.c.l.b16 %v1692
    %v1732 = vpack.c.b16 %v1717, %v1716
    %v1733 = vpack.c.b16 %v1719, %v1718
    %v1734 = vpack.c.b16 %v1721, %v1720
    %v1735 = vpack.c.b16 %v1723, %v1722
    %v1736 = vpack.c.b16 %v1725, %v1724
    %v1737 = vpack.c.b16 %v1727, %v1726
    %v1738 = vpack.c.b16 %v1729, %v1728
    %v1739 = vpack.c.b16 %v1731, %v1730
    %1748 = vmatprep.subr.bf16.mxu0 0
    %1749 = vmatpush1.bf16.msra.mxu0 %v1732
    %1750 = vmatprep.subr.bf16.mxu0 0
    %1751 = vmatpush1.bf16.msra.mxu0 %v1733
    %1752 = vmatprep.subr.bf16.mxu0 0
    %1753 = vmatpush1.bf16.msra.mxu0 %v1734
    %1754 = vmatprep.subr.bf16.mxu0 0
    %1755 = vmatpush1.bf16.msra.mxu0 %v1735
    %1756 = vmatprep.subr.bf16.mxu0 0
    %1757 = vmatpush1.bf16.msra.mxu0 %v1736
    %1758 = vmatprep.subr.bf16.mxu0 0
    %1759 = vmatpush1.bf16.msra.mxu0 %v1737
    %1760 = vmatprep.subr.bf16.mxu0 0
    %1761 = vmatpush1.bf16.msra.mxu0 %v1738
    %1762 = vmatprep.subr.bf16.mxu0 0
    %1763 = vmatpush1.bf16.msra.mxu0 %v1739
    %1764 = vmatprep.subr.bf16.mxu0 0
    %1765 = vmatpush1.bf16.msra.mxu0 0
    %1766 = vmatprep.subr.bf16.mxu0 0
    %1767 = vmatpush1.bf16.msra.mxu0 0
    %1768 = vmatprep.subr.bf16.mxu0 0
    %1769 = vmatpush1.bf16.msra.mxu0 0
    %1770 = vmatprep.subr.bf16.mxu0 0
    %1771 = vmatpush1.bf16.msra.mxu0 0
    %1772 = vmatprep.subr.bf16.mxu0 0
    %1773 = vmatpush1.bf16.msra.mxu0 0
    %1774 = vmatprep.subr.bf16.mxu0 0
    %1775 = vmatpush1.bf16.msra.mxu0 0
    %1776 = vmatprep.subr.bf16.mxu0 0
    %1777 = vmatpush1.bf16.msra.mxu0 0
    %1778 = vmatprep.subr.bf16.mxu0 0
    %1779 = vmatpush1.bf16.msra.mxu0 0
    %1780 = vmatprep.mubr.bf16.mxu0 0
    %1781 = vmatmul.mubr.bf16.gmra.mrb[0].mxu0 %v1661
    %v1782 = vpop.f32.mrb[0].mxu0
    %v1783 = vadd.f32 %v1698, %v1782
    %v1784 = vpop.f32.mrb[0].mxu0
    %v1785 = vpop.f32.mrb[0].mxu0
    %v1786 = vadd.f32 %v1698, %v1785
    %v1787 = vpop.f32.mrb[0].mxu0
    %1788 = vmatprep.mubr.bf16.mxu0 0
    %1789 = vmatmul.mubr.bf16.gmra.mrb[0].mxu0 %v1662
    %v1790 = vpop.f32.mrb[0].mxu0
    %v1791 = vadd.f32 %v1698, %v1790
    %v1792 = vpop.f32.mrb[0].mxu0
    %v1793 = vpop.f32.mrb[0].mxu0
    %v1794 = vadd.f32 %v1698, %v1793
    %v1795 = vpop.f32.mrb[0].mxu0
    %1796 = vmatprep.mubr.bf16.mxu0 0
    %1797 = vmatmul.mubr.bf16.gmra.mrb[0].mxu0 %v1663
    %v1798 = vpop.f32.mrb[0].mxu0
    %v1799 = vadd.f32 %v1698, %v1798
    %v1800 = vpop.f32.mrb[0].mxu0
    %v1801 = vpop.f32.mrb[0].mxu0
    %v1802 = vadd.f32 %v1698, %v1801
    %v1803 = vpop.f32.mrb[0].mxu0
    %1804 = vmatprep.mubr.bf16.mxu0 0
    %1805 = vmatmul.mubr.bf16.gmra.mrb[0].mxu0 %v1664
    %v1806 = vpop.f32.mrb[0].mxu0
    %v1807 = vadd.f32 %v1698, %v1806
    %v1808 = vpop.f32.mrb[0].mxu0
    %v1809 = vpop.f32.mrb[0].mxu0
    %v1810 = vadd.f32 %v1698, %v1809
    %v1811 = vpop.f32.mrb[0].mxu0
    %1812 = vmatprep.mubr.bf16.mxu0 0
    %1813 = vmatmul.mubr.bf16.gmra.mrb[0].mxu0 %v1665
    %v1814 = vpop.f32.mrb[0].mxu0
    %v1815 = vadd.f32 %v1698, %v1814
    %v1816 = vpop.f32.mrb[0].mxu0
    %v1817 = vpop.f32.mrb[0].mxu0
    %v1818 = vadd.f32 %v1698, %v1817
    %v1819 = vpop.f32.mrb[0].mxu0
    %1820 = vmatprep.mubr.bf16.mxu0 0
    %1821 = vmatmul.mubr.bf16.gmra.mrb[0].mxu0 %v1666
    %v1822 = vpop.f32.mrb[0].mxu0
    %v1823 = vadd.f32 %v1698, %v1822
    %v1824 = vpop.f32.mrb[0].mxu0
    %v1825 = vpop.f32.mrb[0].mxu0
    %v1826 = vadd.f32 %v1698, %v1825
    %v1827 = vpop.f32.mrb[0].mxu0
    %1828 = vmatprep.mubr.bf16.mxu0 0
    %1829 = vmatmul.mubr.bf16.gmra.mrb[0].mxu0 %v1667
    %v1830 = vpop.f32.mrb[0].mxu0
    %v1831 = vadd.f32 %v1698, %v1830
    %v1832 = vpop.f32.mrb[0].mxu0
    %v1833 = vpop.f32.mrb[0].mxu0
    %v1834 = vadd.f32 %v1698, %v1833
    %v1835 = vpop.f32.mrb[0].mxu0
    %1836 = vmatprep.mubr.bf16.mxu0 0
    %1837 = vmatmul.mubr.bf16.gmra.mrb[0].mxu0 %v1668
    %v1838 = vpop.f32.mrb[0].mxu0
    %v1839 = vadd.f32 %v1698, %v1838
    %v1840 = vpop.f32.mrb[0].mxu0
    %v1841 = vpop.f32.mrb[0].mxu0
    %v1842 = vadd.f32 %v1698, %v1841
    %v1843 = vpop.f32.mrb[0].mxu0
    %1844 = vmatprep.mubr.bf16.mxu0 0
    %1845 = vmatmul.mubr.bf16.gmra.mrb[0].mxu0 %v1669
    %v1846 = vpop.f32.mrb[0].mxu0
    %v1847 = vadd.f32 %v1698, %v1846
    %v1848 = vpop.f32.mrb[0].mxu0
    %v1849 = vpop.f32.mrb[0].mxu0
    %v1850 = vadd.f32 %v1698, %v1849
    %v1851 = vpop.f32.mrb[0].mxu0
    %1852 = vmatprep.mubr.bf16.mxu0 0
    %1853 = vmatmul.mubr.bf16.gmra.mrb[0].mxu0 %v1670
    %v1854 = vpop.f32.mrb[0].mxu0
    %v1855 = vadd.f32 %v1698, %v1854
    %v1856 = vpop.f32.mrb[0].mxu0
    %v1857 = vpop.f32.mrb[0].mxu0
    %v1858 = vadd.f32 %v1698, %v1857
    %v1859 = vpop.f32.mrb[0].mxu0
    %1860 = vmatprep.mubr.bf16.mxu0 0
    %1861 = vmatmul.mubr.bf16.gmra.mrb[0].mxu0 %v1671
    %v1862 = vpop.f32.mrb[0].mxu0
    %v1863 = vadd.f32 %v1698, %v1862
    %v1864 = vpop.f32.mrb[0].mxu0
    %v1865 = vpop.f32.mrb[0].mxu0
    %v1866 = vadd.f32 %v1698, %v1865
    %v1867 = vpop.f32.mrb[0].mxu0
    %1868 = vmatprep.mubr.bf16.mxu0 0
    %1869 = vmatmul.mubr.bf16.gmra.mrb[0].mxu0 %v1672
    %v1870 = vpop.f32.mrb[0].mxu0
    %v1871 = vadd.f32 %v1698, %v1870
    %v1872 = vpop.f32.mrb[0].mxu0
    %v1873 = vpop.f32.mrb[0].mxu0
    %v1874 = vadd.f32 %v1698, %v1873
    %v1875 = vpop.f32.mrb[0].mxu0
    %1876 = vmatprep.mubr.bf16.mxu0 0
    %1877 = vmatmul.mubr.bf16.gmra.mrb[0].mxu0 %v1673
    %v1878 = vpop.f32.mrb[0].mxu0
    %v1879 = vadd.f32 %v1698, %v1878
    %v1880 = vpop.f32.mrb[0].mxu0
    %v1881 = vpop.f32.mrb[0].mxu0
    %v1882 = vadd.f32 %v1698, %v1881
    %v1883 = vpop.f32.mrb[0].mxu0
    %1884 = vmatprep.mubr.bf16.mxu0 0
    %1885 = vmatmul.mubr.bf16.gmra.mrb[0].mxu0 %v1674
    %v1886 = vpop.f32.mrb[0].mxu0
    %v1887 = vadd.f32 %v1698, %v1886
    %v1888 = vpop.f32.mrb[0].mxu0
    %v1889 = vpop.f32.mrb[0].mxu0
    %v1890 = vadd.f32 %v1698, %v1889
    %v1891 = vpop.f32.mrb[0].mxu0
    %1892 = vmatprep.mubr.bf16.mxu0 0
    %1893 = vmatmul.mubr.bf16.gmra.mrb[0].mxu0 %v1675
    %v1894 = vpop.f32.mrb[0].mxu0
    %v1895 = vadd.f32 %v1698, %v1894
    %v1896 = vpop.f32.mrb[0].mxu0
    %v1897 = vpop.f32.mrb[0].mxu0
    %v1898 = vadd.f32 %v1698, %v1897
    %v1899 = vpop.f32.mrb[0].mxu0
    %1900 = vmatprep.mubr.bf16.mxu0 0
    %1901 = vmatmul.mubr.bf16.gmra.mrb[0].mxu0 %v1676
    %v1902 = vpop.f32.mrb[0].mxu0
    %v1903 = vadd.f32 %v1698, %v1902
    %v1904 = vpop.f32.mrb[0].mxu0
    %v1905 = vpop.f32.mrb[0].mxu0
    %v1906 = vadd.f32 %v1698, %v1905
    %v1907 = vpop.f32.mrb[0].mxu0
    %1908 = vdwg.mxu0
    %v1909 = vmul.f32 %v1783, 0.5
    %v1910 = vmul.f32 %v1786, 0.5
    %v1911 = vmul.f32 %v1791, 0.5
    %v1912 = vmul.f32 %v1794, 0.5
    %v1913 = vmul.f32 %v1799, 0.5
    %v1914 = vmul.f32 %v1802, 0.5
    %v1915 = vmul.f32 %v1807, 0.5
    %v1916 = vmul.f32 %v1810, 0.5
    %v1917 = vmul.f32 %v1815, 0.5
    %v1918 = vmul.f32 %v1818, 0.5
    %v1919 = vmul.f32 %v1823, 0.5
    %v1920 = vmul.f32 %v1826, 0.5
    %v1921 = vmul.f32 %v1831, 0.5
    %v1922 = vmul.f32 %v1834, 0.5
    %v1923 = vmul.f32 %v1839, 0.5
    %v1924 = vmul.f32 %v1842, 0.5
    %v1925 = vmul.f32 %v1847, 0.5
    %v1926 = vmul.f32 %v1850, 0.5
    %v1927 = vmul.f32 %v1855, 0.5
    %v1928 = vmul.f32 %v1858, 0.5
    %v1929 = vmul.f32 %v1863, 0.5
    %v1930 = vmul.f32 %v1866, 0.5
    %v1931 = vmul.f32 %v1871, 0.5
    %v1932 = vmul.f32 %v1874, 0.5
    %v1933 = vmul.f32 %v1879, 0.5
    %v1934 = vmul.f32 %v1882, 0.5
    %v1935 = vmul.f32 %v1887, 0.5
    %v1936 = vmul.f32 %v1890, 0.5
    %v1937 = vmul.f32 %v1895, 0.5
    %v1938 = vmul.f32 %v1898, 0.5
    %v1939 = vmul.f32 %v1903, 0.5
    %v1940 = vmul.f32 %v1906, 0.5
    %v1941 = vtanh.pop %v1909
    %v1942 = vtanh.pop %v1910
    %v1943 = vtanh.pop %v1911
    %v1944 = vtanh.pop %v1912
    %v1945 = vtanh.pop %v1913
    %v1946 = vtanh.pop %v1914
    %v1947 = vtanh.pop %v1915
    %v1948 = vtanh.pop %v1916
    %v1949 = vtanh.pop %v1917
    %v1950 = vtanh.pop %v1918
    %v1951 = vtanh.pop %v1919
    %v1952 = vtanh.pop %v1920
    %v1953 = vtanh.pop %v1921
    %v1954 = vtanh.pop %v1922
    %v1955 = vtanh.pop %v1923
    %v1956 = vtanh.pop %v1924
    %v1957 = vtanh.pop %v1925
    %v1958 = vtanh.pop %v1926
    %v1959 = vtanh.pop %v1927
    %v1960 = vtanh.pop %v1928
    %v1961 = vtanh.pop %v1929
    %v1962 = vtanh.pop %v1930
    %v1963 = vtanh.pop %v1931
    %v1964 = vtanh.pop %v1932
    %v1965 = vtanh.pop %v1933
    %v1966 = vtanh.pop %v1934
    %v1967 = vtanh.pop %v1935
    %v1968 = vtanh.pop %v1936
    %v1969 = vtanh.pop %v1937
    %v1970 = vtanh.pop %v1938
    %v1971 = vtanh.pop %v1939
    %v1972 = vtanh.pop %v1940
    %v1973 = vmul.f32 %v1941, 0.5
    %v1974 = vmul.f32 %v1942, 0.5
    %v1975 = vmul.f32 %v1943, 0.5
    %v1976 = vmul.f32 %v1944, 0.5
    %v1977 = vmul.f32 %v1945, 0.5
    %v1978 = vmul.f32 %v1946, 0.5
    %v1979 = vmul.f32 %v1947, 0.5
    %v1980 = vmul.f32 %v1948, 0.5
    %v1981 = vmul.f32 %v1949, 0.5
    %v1982 = vmul.f32 %v1950, 0.5
    %v1983 = vmul.f32 %v1951, 0.5
    %v1984 = vmul.f32 %v1952, 0.5
    %v1985 = vmul.f32 %v1953, 0.5
    %v1986 = vmul.f32 %v1954, 0.5
    %v1987 = vmul.f32 %v1955, 0.5
    %v1988 = vmul.f32 %v1956, 0.5
    %v1989 = vmul.f32 %v1957, 0.5
    %v1990 = vmul.f32 %v1958, 0.5
    %v1991 = vmul.f32 %v1959, 0.5
    %v1992 = vmul.f32 %v1960, 0.5
    %v1993 = vmul.f32 %v1961, 0.5
    %v1994 = vmul.f32 %v1962, 0.5
    %v1995 = vmul.f32 %v1963, 0.5
    %v1996 = vmul.f32 %v1964, 0.5
    %v1997 = vmul.f32 %v1965, 0.5
    %v1998 = vmul.f32 %v1966, 0.5
    %v1999 = vmul.f32 %v1967, 0.5
    %v2000 = vmul.f32 %v1968, 0.5
    %v2001 = vmul.f32 %v1969, 0.5
    %v2002 = vmul.f32 %v1970, 0.5
    %v2003 = vmul.f32 %v1971, 0.5
    %v2004 = vmul.f32 %v1972, 0.5
    %v2005 = vadd.f32 %v1973, 0.5
    %v2006 = vadd.f32 %v1974, 0.5
    %v2007 = vadd.f32 %v1975, 0.5
    %v2008 = vadd.f32 %v1976, 0.5
    %v2009 = vadd.f32 %v1977, 0.5
    %v2010 = vadd.f32 %v1978, 0.5
    %v2011 = vadd.f32 %v1979, 0.5
    %v2012 = vadd.f32 %v1980, 0.5
    %v2013 = vadd.f32 %v1981, 0.5
    %v2014 = vadd.f32 %v1982, 0.5
    %v2015 = vadd.f32 %v1983, 0.5
    %v2016 = vadd.f32 %v1984, 0.5
    %v2017 = vadd.f32 %v1985, 0.5
    %v2018 = vadd.f32 %v1986, 0.5
    %v2019 = vadd.f32 %v1987, 0.5
    %v2020 = vadd.f32 %v1988, 0.5
    %v2021 = vadd.f32 %v1989, 0.5
    %v2022 = vadd.f32 %v1990, 0.5
    %v2023 = vadd.f32 %v1991, 0.5
    %v2024 = vadd.f32 %v1992, 0.5
    %v2025 = vadd.f32 %v1993, 0.5
    %v2026 = vadd.f32 %v1994, 0.5
    %v2027 = vadd.f32 %v1995, 0.5
    %v2028 = vadd.f32 %v1996, 0.5
    %v2029 = vadd.f32 %v1997, 0.5
    %v2030 = vadd.f32 %v1998, 0.5
    %v2031 = vadd.f32 %v1999, 0.5
    %v2032 = vadd.f32 %v2000, 0.5
    %v2033 = vadd.f32 %v2001, 0.5
    %v2034 = vadd.f32 %v2002, 0.5
    %v2035 = vadd.f32 %v2003, 0.5
    %v2036 = vadd.f32 %v2004, 0.5
    %v2037 = vpack.c.bf16 %v2006, %v2005
    %v2038 = vpack.c.bf16 %v2008, %v2007
    %v2039 = vpack.c.bf16 %v2010, %v2009
    %v2040 = vpack.c.bf16 %v2012, %v2011
    %v2041 = vpack.c.bf16 %v2014, %v2013
    %v2042 = vpack.c.bf16 %v2016, %v2015
    %v2043 = vpack.c.bf16 %v2018, %v2017
    %v2044 = vpack.c.bf16 %v2020, %v2019
    %v2045 = vpack.c.bf16 %v2022, %v2021
    %v2046 = vpack.c.bf16 %v2024, %v2023
    %v2047 = vpack.c.bf16 %v2026, %v2025
    %v2048 = vpack.c.bf16 %v2028, %v2027
    %v2049 = vpack.c.bf16 %v2030, %v2029
    %v2050 = vpack.c.bf16 %v2032, %v2031
    %v2051 = vpack.c.bf16 %v2034, %v2033
    %v2052 = vpack.c.bf16 %v2036, %v2035
    %v2069 = vunpack.c.l.b16 %v2037
    %v2070 = vunpack.c.h.b16 %v2037
    %v2071 = vunpack.c.l.b16 %v2038
    %v2072 = vunpack.c.h.b16 %v2038
    %v2073 = vunpack.c.l.b16 %v2039
    %v2074 = vunpack.c.h.b16 %v2039
    %v2075 = vunpack.c.l.b16 %v2040
    %v2076 = vunpack.c.h.b16 %v2040
    %v2077 = vunpack.c.l.b16 %v2041
    %v2078 = vunpack.c.h.b16 %v2041
    %v2079 = vunpack.c.l.b16 %v2042
    %v2080 = vunpack.c.h.b16 %v2042
    %v2081 = vunpack.c.l.b16 %v2043
    %v2082 = vunpack.c.h.b16 %v2043
    %v2083 = vunpack.c.l.b16 %v2044
    %v2084 = vunpack.c.h.b16 %v2044
    %v2085 = vunpack.c.l.b16 %v2045
    %v2086 = vunpack.c.h.b16 %v2045
    %v2087 = vunpack.c.l.b16 %v2046
    %v2088 = vunpack.c.h.b16 %v2046
    %v2089 = vunpack.c.l.b16 %v2047
    %v2090 = vunpack.c.h.b16 %v2047
    %v2091 = vunpack.c.l.b16 %v2048
    %v2092 = vunpack.c.h.b16 %v2048
    %v2093 = vunpack.c.l.b16 %v2049
    %v2094 = vunpack.c.h.b16 %v2049
    %v2095 = vunpack.c.l.b16 %v2050
    %v2096 = vunpack.c.h.b16 %v2050
    %v2097 = vunpack.c.l.b16 %v2051
    %v2098 = vunpack.c.h.b16 %v2051
    %v2099 = vunpack.c.l.b16 %v2052
    %v2100 = vunpack.c.h.b16 %v2052
    %v2101 = vpack.c.b16 %v2069, %v2069
    %v2102 = vpack.c.b16 %v2070, %v2070
    %v2103 = vpack.c.b16 %v2071, %v2071
    %v2104 = vpack.c.b16 %v2072, %v2072
    %v2105 = vpack.c.b16 %v2073, %v2073
    %v2106 = vpack.c.b16 %v2074, %v2074
    %v2107 = vpack.c.b16 %v2075, %v2075
    %v2108 = vpack.c.b16 %v2076, %v2076
    %v2109 = vpack.c.b16 %v2077, %v2077
    %v2110 = vpack.c.b16 %v2078, %v2078
    %v2111 = vpack.c.b16 %v2079, %v2079
    %v2112 = vpack.c.b16 %v2080, %v2080
    %v2113 = vpack.c.b16 %v2081, %v2081
    %v2114 = vpack.c.b16 %v2082, %v2082
    %v2115 = vpack.c.b16 %v2083, %v2083
    %v2116 = vpack.c.b16 %v2084, %v2084
    %v2117 = vpack.c.b16 %v2085, %v2085
    %v2118 = vpack.c.b16 %v2086, %v2086
    %v2119 = vpack.c.b16 %v2087, %v2087
    %v2120 = vpack.c.b16 %v2088, %v2088
    %v2121 = vpack.c.b16 %v2089, %v2089
    %v2122 = vpack.c.b16 %v2090, %v2090
    %v2123 = vpack.c.b16 %v2091, %v2091
    %v2124 = vpack.c.b16 %v2092, %v2092
    %v2125 = vpack.c.b16 %v2093, %v2093
    %v2126 = vpack.c.b16 %v2094, %v2094
    %v2127 = vpack.c.b16 %v2095, %v2095
    %v2128 = vpack.c.b16 %v2096, %v2096
    %v2129 = vpack.c.b16 %v2097, %v2097
    %v2130 = vpack.c.b16 %v2098, %v2098
    %v2131 = vpack.c.b16 %v2099, %v2099
    %v2132 = vpack.c.b16 %v2100, %v2100
    %2165 = vst [vmem:[#allocation13] sm:$0xf] %v2101
    %2166 = vst [vmem:[#allocation13 + $0x4] sm:$0xf] %v2102
    %2167 = vst [vmem:[#allocation13 + $0x8] sm:$0xf] %v2103
    %2168 = vst [vmem:[#allocation13 + $0xc] sm:$0xf] %v2104
    %2169 = vst [vmem:[#allocation13 + $0x10] sm:$0xf] %v2105
    %2170 = vst [vmem:[#allocation13 + $0x14] sm:$0xf] %v2106
    %2171 = vst [vmem:[#allocation13 + $0x18] sm:$0xf] %v2107
    %2172 = vst [vmem:[#allocation13 + $0x1c] sm:$0xf] %v2108
    %2173 = vst [vmem:[#allocation13 + $0x20] sm:$0xf] %v2109
    %2174 = vst [vmem:[#allocation13 + $0x24] sm:$0xf] %v2110
    %2175 = vst [vmem:[#allocation13 + $0x28] sm:$0xf] %v2111
    %2176 = vst [vmem:[#allocation13 + $0x2c] sm:$0xf] %v2112
    %2177 = vst [vmem:[#allocation13 + $0x30] sm:$0xf] %v2113
    %2178 = vst [vmem:[#allocation13 + $0x34] sm:$0xf] %v2114
    %2179 = vst [vmem:[#allocation13 + $0x38] sm:$0xf] %v2115
    %2180 = vst [vmem:[#allocation13 + $0x3c] sm:$0xf] %v2116
    %2181 = vst [vmem:[#allocation13 + $0x40] sm:$0xf] %v2117
    %2182 = vst [vmem:[#allocation13 + $0x44] sm:$0xf] %v2118
    %2183 = vst [vmem:[#allocation13 + $0x48] sm:$0xf] %v2119
    %2184 = vst [vmem:[#allocation13 + $0x4c] sm:$0xf] %v2120
    %2185 = vst [vmem:[#allocation13 + $0x50] sm:$0xf] %v2121
    %2186 = vst [vmem:[#allocation13 + $0x54] sm:$0xf] %v2122
    %2187 = vst [vmem:[#allocation13 + $0x58] sm:$0xf] %v2123
    %2188 = vst [vmem:[#allocation13 + $0x5c] sm:$0xf] %v2124
    %2189 = vst [vmem:[#allocation13 + $0x60] sm:$0xf] %v2125
    %2190 = vst [vmem:[#allocation13 + $0x64] sm:$0xf] %v2126
    %2191 = vst [vmem:[#allocation13 + $0x68] sm:$0xf] %v2127
    %2192 = vst [vmem:[#allocation13 + $0x6c] sm:$0xf] %v2128
    %2193 = vst [vmem:[#allocation13 + $0x70] sm:$0xf] %v2129
    %2194 = vst [vmem:[#allocation13 + $0x74] sm:$0xf] %v2130
    %2195 = vst [vmem:[#allocation13 + $0x78] sm:$0xf] %v2131
    %2196 = vst [vmem:[#allocation13 + $0x7c] sm:$0xf] %v2132
    // Predicated region
    $region70: #{tpu_custom_call.1} parent=1 // pred_check
      _
    $region71: #{tpu_custom_call.1} parent=1 // pred_check_branch
      %2198 = sbr.rel (0) target = $region73
    $region72: #{tpu_custom_call.1} parent=1 // pred_region
      %s2200 = ssub.s32 2048, 2048
      %2201 = vsyncadd [#allocation4], %s2200
      %s2202 = sshll.u32 [#allocation13], 4
      %s2203 = int_to_ptr.vmem [resolvable:$true] %s2202
      %2208 = dma.vmem_to_hbm [thread:$0]  %s2203, 2048, %s11, [#allocation4], 64, 64, 4
    $region73: #{tpu_custom_call.1} parent=1 // pred_fallthru
      _
    // Predicated region
    $region74: #{tpu_custom_call.1} parent=1 // pred_check
      _
    $region75: #{tpu_custom_call.1} parent=1 // pred_check_branch
      %2210 = sbr.rel (0) target = $region77
    $region76: #{tpu_custom_call.1} parent=1 // pred_region
      %2211 = dma.done [#allocation4], 2048
    $region77: #{tpu_custom_call.1} parent=1 // pred_fallthru
      _
    %2212 = vsyncpa [#allocation3], 1
    %2213 = vsyncpa [#allocation6], 1
    %2214 = vsyncpa [#allocation9], 1
    %2215 = vsyncpa [#allocation12], 1
    %2216 = vsyncpa [#allocation4], 1

</llo_original>
